<compile_context>
chip_gen: v5e
topology: v5e:2x2
jax: 0.10.0
libtpu: 0.0.40
codegen_flags: <defaults>
</compile_context>

<pallas_src>
import functools

import numpy as np
import jax
import jax.numpy as jnp
from jax.experimental import pallas as pl
from jax.experimental.pallas import tpu as pltpu

LOG2PI = float(np.log(2.0 * np.pi))


def _recip(x):
    # EUP approx reciprocal + one Newton-Raphson step (error ~eps^2, well under
    # the 1e-4 accuracy budget) instead of a full-precision VPU divide chain.
    r = pl.reciprocal(x, approx=True)
    return r * (2.0 - x * r)


# ---------------------------------------------------------------------------
# forward(): (m, softplus(V_)).  Per review, the tiny standalone softplus
# kernel is dropped -- softplus is fused into the EM kernel below, and the
# standalone forward() just uses plain JAX.
# ---------------------------------------------------------------------------
def dirniw_forward(m, V_):
    return m, jax.nn.softplus(V_)


# ---------------------------------------------------------------------------
# Fused map_em kernel: all EM iterations for one block of Bt batch elements.
# ---------------------------------------------------------------------------
def _map_em_kernel(*refs, d, p, tau, num_iters, has_mask):
    if has_mask:
        data_ref, mask_ref, m_ref, vraw_ref, pi_out, mu_out, sg_out = refs
    else:
        data_ref, m_ref, vraw_ref, pi_out, mu_out, sg_out = refs
        mask_ref = None

    x = data_ref[...]                                      # (Bt, N, d)
    bt, n = x.shape[0], x.shape[1]
    x2 = x * x
    # Helper constants (hoisted out of the EM loop):
    ones_n = jnp.ones((bt, n, 1), dtype=jnp.float32)       # wsum via a dot, no qq transpose
    ones_d = jnp.ones((bt, 1, d), dtype=jnp.float32)       # per-component reductions -> (Bt,1,p)

    # Prior parameters; softplus(V_) fused here (numerically stable form).
    m_p = m_ref[...]                                       # (p, d)
    v_raw = vraw_ref[...]
    V_p = jnp.maximum(v_raw, 0.0) + jnp.log1p(jnp.exp(-jnp.abs(v_raw)))
    m_tau = m_p * tau
    vm_tau = (V_p + m_p * m_p) * tau

    # Mixture init = prior mode: pi = 1/p, mu = m, Sigma = V (per batch elem).
    logpi = jnp.full((bt, 1, p), float(np.log(1.0 / p)), dtype=jnp.float32)
    mu = jnp.broadcast_to(m_p[None], (bt, p, d)).astype(jnp.float32)
    Sigma = jnp.broadcast_to(V_p[None], (bt, p, d)).astype(jnp.float32)

    if has_mask:
        maskcol = mask_ref[...]                            # (Bt, N, 1)

    pi = jnp.full((bt, 1, p), 1.0 / p, dtype=jnp.float32)

    # num_iters is a small static int -> unrolled in-kernel loop (no HBM
    # round-trips / relaunches between EM iterations).
    for _ in range(num_iters):
        # ---------------- E-step (mog_eval) ----------------
        s_inv = _recip(Sigma)                                                # (Bt,p,d)
        # logdet + sum(mu^2/Sigma) per component, produced directly in the
        # (Bt,1,p) orientation via a tiny dot (same pattern as quad1).
        cterm = jnp.einsum("bkd,bpd->bkp", ones_d,
                           jnp.log(Sigma) + mu * mu * s_inv,
                           preferred_element_type=jnp.float32)               # (Bt,1,p)
        quad1 = jnp.einsum("bnd,bpd->bnp", x2, s_inv,
                           preferred_element_type=jnp.float32)               # (Bt,N,p)
        quad2 = jnp.einsum("bnd,bpd->bnp", x, mu * s_inv,
                           preferred_element_type=jnp.float32)               # (Bt,N,p)
        jll = -0.5 * (d * LOG2PI + cterm + quad1 - 2.0 * quad2) + logpi      # (Bt,N,p)
        jmax = jnp.max(jll, axis=-1, keepdims=True)                          # (Bt,N,1)
        unn = jnp.exp(jll - jmax)
        qq = unn * _recip(jnp.sum(unn, axis=-1, keepdims=True))              # exp(cll)
        if has_mask:
            qq = qq * maskcol

        # ---------------- M-step (map_m_step) ----------------
        # Contract over N directly with dot_general -- no (N,p)->(p,N) transpose.
        wsum_p1 = jnp.einsum("bnp,bnk->bpk", qq, ones_n,
                             preferred_element_type=jnp.float32)             # (Bt,p,1)
        wxsum = jnp.einsum("bnp,bnd->bpd", qq, x,
                           preferred_element_type=jnp.float32)               # (Bt,p,d)
        wxxsum = jnp.einsum("bnp,bnd->bpd", qq, x2,
                            preferred_element_type=jnp.float32)              # (Bt,p,d)

        inv_wr = _recip(wsum_p1 + tau)                                       # (Bt,p,1)
        mu = (wxsum + m_tau[None]) * inv_wr
        Sigma = (wxxsum + vm_tau[None]) * inv_wr - mu * mu
        # Guard against numerically non-positive variances for degenerate /
        # fully-masked components (no effect on well-conditioned inputs).
        Sigma = jnp.maximum(Sigma, 1e-20)

        wr_1p = jnp.sum(qq, axis=1, keepdims=True) + tau                     # (Bt,1,p)
        pi = wr_1p * _recip(jnp.sum(wr_1p, axis=-1, keepdims=True))          # (Bt,1,p)
        logpi = jnp.log(pi)

    pi_out[...] = pi
    mu_out[...] = mu
    sg_out[...] = Sigma


def _pick_block_b(B, N, d, p):
    """Largest batch-block size that divides B, fits a modest VMEM budget and
    keeps the grid extent >= 2 (so v7x's two TensorCores both get work)."""
    budget = 4 * 1024 * 1024                      # bytes for one block's temporaries
    per_b = 6 * N * max(d, p) * 4 + N * 4         # data/x2/qq/jll/... + mask (rough)
    cap = max(1, budget // per_b)
    if B >= 2:
        cap = min(cap, max(1, B // 2))
    cap = min(cap, B)
    bt = 1
    for c in range(1, cap + 1):
        if B % c == 0:
            bt = c
    return bt


def map_em(m, V_, data, mask=None, num_iters=3, tau=1.0):
    """DirNIWNet.map_em with the prior given as raw (m, V_); softplus(V_) is
    applied inside the kernel (== self.forward() in the PyTorch module)."""
    B, N, d = data.shape
    p = m.shape[0]
    data = data.astype(jnp.float32)
    has_mask = mask is not None
    bt = _pick_block_b(B, N, d, p)
    nb = B // bt

    kernel = functools.partial(_map_em_kernel, d=d, p=p, tau=float(tau),
                               num_iters=int(num_iters), has_mask=has_mask)

    in_specs = [pl.BlockSpec((bt, N, d), lambda b: (b, 0, 0))]     # data
    args = [data]
    if has_mask:
        in_specs.append(pl.BlockSpec((bt, N, 1), lambda b: (b, 0, 0)))
        args.append(mask.astype(jnp.float32).reshape(B, N, 1))
    in_specs += [pl.BlockSpec((p, d), lambda b: (0, 0)),           # prior m
                 pl.BlockSpec((p, d), lambda b: (0, 0))]           # prior V_ (raw)
    args += [m.astype(jnp.float32), V_.astype(jnp.float32)]

    pi, mu, Sigma = pl.pallas_call(
        kernel,
        grid=(nb,),
        in_specs=in_specs,
        out_specs=[
            pl.BlockSpec((bt, 1, p), lambda b: (b, 0, 0)),
            pl.BlockSpec((bt, p, d), lambda b: (b, 0, 0)),
            pl.BlockSpec((bt, p, d), lambda b: (b, 0, 0)),
        ],
        out_shape=[
            jax.ShapeDtypeStruct((B, 1, p), jnp.float32),
            jax.ShapeDtypeStruct((B, p, d), jnp.float32),
            jax.ShapeDtypeStruct((B, p, d), jnp.float32),
        ],
        compiler_params=pltpu.CompilerParams(
            dimension_semantics=("parallel",),
            vmem_limit_bytes=32 * 1024 * 1024,   # safe on v5e/v6e/v7x; above v5e default
        ),
    )(*args)
    return pi[:, 0, :], mu, Sigma


# ---------------------------------------------------------------------------
# Pure-JAX reference (mirrors the PyTorch code) for correctness checking.
# ---------------------------------------------------------------------------
def _ref_map_em(m, V, data, mask=None, num_iters=3, tau=1.0):
    B, N, d = data.shape
    p = m.shape[0]
    if mask is None:
        mask = jnp.ones((B, N), data.dtype)
    pi = jnp.full((B, p), 1.0 / p, data.dtype)
    mu = jnp.broadcast_to(m[None], (B, p, d))
    Sigma = jnp.broadcast_to(V[None], (B, p, d))
    for _ in range(num_iters):
        jll = -0.5 * (
            d * np.log(2.0 * np.pi)
            + jnp.sum(jnp.log(Sigma), -1)[:, None, :]
            + jnp.einsum("bnd,bpd->bnp", data ** 2, 1.0 / Sigma)
            + jnp.sum(mu ** 2 / Sigma, -1)[:, None, :]
            - 2.0 * jnp.einsum("bnd,bpd->bnp", data, mu / Sigma)
        ) + jnp.log(pi)[:, None, :]
        mll = jax.scipy.special.logsumexp(jll, axis=-1, keepdims=True)
        qq = jnp.exp(jll - mll) * mask[..., None]
        wsum_reg = qq.sum(1) + tau
        wxsum = jnp.einsum("bnp,bnd->bpd", qq, data)
        wxxsum = jnp.einsum("bnp,bnd->bpd", qq, data ** 2)
        pi = wsum_reg / wsum_reg.sum(1, keepdims=True)
        mu = (wxsum + m[None] * tau) / wsum_reg[..., None]
        Sigma = (wxxsum + (V + m ** 2)[None] * tau) / wsum_reg[..., None] - mu ** 2
    return pi, mu, Sigma


if __name__ == "__main__":
    p, d = 4, 8
    B, N = 2, 16

    key = jax.random.PRNGKey(0)
    k1, k2, k3, k4 = jax.random.split(key, 4)

    # Deterministic parameter init mirroring DirNIWNet.__init__
    m = (0.1 * jax.random.normal(k1, (p, d))).astype(jnp.float32)
    V_ = (float(np.log(np.e - 1.0))
          + (0.001 / np.sqrt(d)) * jax.random.normal(k2, (p, d))
          ).astype(jnp.float32)
    data = jax.random.normal(k3, (B, N, d), dtype=jnp.float32)
    mask = (jax.random.uniform(k4, (B, N)) > 0.25).astype(jnp.float32)

    # forward() semantics: (m, softplus(V_))
    m_out, V = dirniw_forward(m, V_)

    # map_em() via the single fused Pallas kernel (mask=None fast path + masked path)
    pi, mu, Sigma = map_em(m, V_, data, mask=None, num_iters=3, tau=1.0)
    pi_m, mu_m, sg_m = map_em(m, V_, data, mask=mask, num_iters=3, tau=1.0)
    jax.block_until_ready((m_out, V, pi, mu, Sigma, pi_m, mu_m, sg_m))

    # correctness vs pure-JAX reference of the PyTorch math
    V_ref = jax.nn.softplus(V_)
    pi_r, mu_r, sg_r = _ref_map_em(m, V_ref, data, None, 3, 1.0)
    pi_rm, mu_rm, sg_rm = _ref_map_em(m, V_ref, data, mask, 3, 1.0)

    # tolerance budget includes the EUP approx-reciprocal (+1 Newton step) path
    tol = dict(rtol=2e-4, atol=1e-4)
    np.testing.assert_allclose(np.asarray(V), np.asarray(V_ref), rtol=1e-6, atol=1e-6)
    np.testing.assert_allclose(np.asarray(pi), np.asarray(pi_r), **tol)
    np.testing.assert_allclose(np.asarray(mu), np.asarray(mu_r), **tol)
    np.testing.assert_allclose(np.asarray(Sigma), np.asarray(sg_r), **tol)
    np.testing.assert_allclose(np.asarray(pi_m), np.asarray(pi_rm), **tol)
    np.testing.assert_allclose(np.asarray(mu_m), np.asarray(mu_rm), **tol)
    np.testing.assert_allclose(np.asarray(sg_m), np.asarray(sg_rm), **tol)

    print("KERNEL_OK")
</pallas_src>

<mosaic_0001>
module attributes {stable_mosaic.version = 11 : i64} {
  func.func @_map_em_kernel(%arg0: i32, %arg1: memref<1x16x8xf32, #tpu.memory_space<vmem>>, %arg2: memref<4x8xf32, #tpu.memory_space<vmem>>, %arg3: memref<4x8xf32, #tpu.memory_space<vmem>>, %arg4: memref<1x1x4xf32, #tpu.memory_space<vmem>>, %arg5: memref<1x4x8xf32, #tpu.memory_space<vmem>>, %arg6: memref<1x4x8xf32, #tpu.memory_space<vmem>>) attributes {dimension_semantics = [#tpu.dimension_semantics<parallel>], iteration_bounds = array<i64: 2>, scalar_prefetch = 0 : i64, scratch_operands = 0 : i64, tpu.core_type = #tpu.core_type<tc>, window_params = [{transform_indices = @transform_0, window_bounds = array<i64: 1, 16, 8>}, {pipeline_mode = #tpu.pipeline_mode<synchronous>, transform_indices = @transform_1, window_bounds = array<i64: 4, 8>}, {pipeline_mode = #tpu.pipeline_mode<synchronous>, transform_indices = @transform_2, window_bounds = array<i64: 4, 8>}, {transform_indices = @transform_3, window_bounds = array<i64: 1, 1, 4>}, {transform_indices = @transform_4, window_bounds = array<i64: 1, 4, 8>}, {transform_indices = @transform_5, window_bounds = array<i64: 1, 4, 8>}]} {
    %c0 = arith.constant 0 : index
    %c0_0 = arith.constant 0 : index
    %c0_1 = arith.constant 0 : index
    %0 = vector.load %arg1[%c0, %c0_0, %c0_1] : memref<1x16x8xf32, #tpu.memory_space<vmem>>, vector<1x16x8xf32>
    %1 = arith.mulf %0, %0 : vector<1x16x8xf32>
    %cst = arith.constant 1.000000e+00 : f32
    %2 = vector.broadcast %cst : f32 to vector<1x16x1xf32>
    %cst_2 = arith.constant 1.000000e+00 : f32
    %3 = vector.broadcast %cst_2 : f32 to vector<1x1x8xf32>
    %c0_3 = arith.constant 0 : index
    %c0_4 = arith.constant 0 : index
    %4 = vector.load %arg2[%c0_3, %c0_4] : memref<4x8xf32, #tpu.memory_space<vmem>>, vector<4x8xf32>
    %c0_5 = arith.constant 0 : index
    %c0_6 = arith.constant 0 : index
    %5 = vector.load %arg3[%c0_5, %c0_6] : memref<4x8xf32, #tpu.memory_space<vmem>>, vector<4x8xf32>
    %cst_7 = arith.constant 0.000000e+00 : f32
    %6 = vector.broadcast %cst_7 : f32 to vector<4x8xf32>
    %7 = arith.maximumf %5, %6 : vector<4x8xf32>
    %8 = math.absf %5 : vector<4x8xf32>
    %cst_8 = arith.constant 0.000000e+00 : f32
    %9 = vector.broadcast %cst_8 : f32 to vector<4x8xf32>
    %10 = arith.subf %9, %8 : vector<4x8xf32>
    %11 = math.exp %10 : vector<4x8xf32>
    %12 = math.log1p %11 : vector<4x8xf32>
    %13 = arith.addf %7, %12 : vector<4x8xf32>
    %cst_9 = arith.constant 1.000000e+00 : f32
    %14 = vector.broadcast %cst_9 : f32 to vector<4x8xf32>
    %15 = arith.mulf %4, %14 : vector<4x8xf32>
    %16 = arith.mulf %4, %4 : vector<4x8xf32>
    %17 = arith.addf %13, %16 : vector<4x8xf32>
    %cst_10 = arith.constant 1.000000e+00 : f32
    %18 = vector.broadcast %cst_10 : f32 to vector<4x8xf32>
    %19 = arith.mulf %17, %18 : vector<4x8xf32>
    %cst_11 = arith.constant -1.38629436 : f32
    %20 = vector.broadcast %cst_11 : f32 to vector<1x1x4xf32>
    %21 = vector.shape_cast %4 : vector<4x8xf32> to vector<1x4x8xf32>
    %22 = vector.shape_cast %13 : vector<4x8xf32> to vector<1x4x8xf32>
    %23 = tpu.reciprocal %22 {approx = true} : vector<1x4x8xf32> -> vector<1x4x8xf32>
    %24 = arith.mulf %22, %23 : vector<1x4x8xf32>
    %cst_12 = arith.constant 2.000000e+00 : f32
    %25 = vector.broadcast %cst_12 : f32 to vector<1x4x8xf32>
    %26 = arith.subf %25, %24 : vector<1x4x8xf32>
    %27 = arith.mulf %23, %26 : vector<1x4x8xf32>
    %28 = math.log %22 : vector<1x4x8xf32>
    %29 = arith.mulf %21, %21 : vector<1x4x8xf32>
    %30 = arith.mulf %29, %27 : vector<1x4x8xf32>
    %31 = arith.addf %28, %30 : vector<1x4x8xf32>
    "tpu.trace_start"() <{level = 10 : i32, message = "bkd,bpd->bkp"}> : () -> ()
    %cst_13 = arith.constant dense<0.000000e+00> : vector<1x1x4xf32>
    %32 = tpu.matmul %3, %31, %cst_13 {dimension_numbers = #tpu.dot_dimension_numbers<[2], [2], [1], [1], [0, 0, 0, 1, 1, 1], [0], [0]>} : vector<1x1x8xf32>, vector<1x4x8xf32>, vector<1x1x4xf32> -> vector<1x1x4xf32>
    "tpu.trace_stop"() : () -> ()
    "tpu.trace_start"() <{level = 10 : i32, message = "bnd,bpd->bnp"}> : () -> ()
    %cst_14 = arith.constant dense<0.000000e+00> : vector<1x16x4xf32>
    %33 = tpu.matmul %1, %27, %cst_14 {dimension_numbers = #tpu.dot_dimension_numbers<[2], [2], [1], [1], [0, 0, 0, 1, 1, 1], [0], [0]>} : vector<1x16x8xf32>, vector<1x4x8xf32>, vector<1x16x4xf32> -> vector<1x16x4xf32>
    "tpu.trace_stop"() : () -> ()
    %34 = arith.mulf %21, %27 : vector<1x4x8xf32>
    "tpu.trace_start"() <{level = 10 : i32, message = "bnd,bpd->bnp"}> : () -> ()
    %cst_15 = arith.constant dense<0.000000e+00> : vector<1x16x4xf32>
    %35 = tpu.matmul %0, %34, %cst_15 {dimension_numbers = #tpu.dot_dimension_numbers<[2], [2], [1], [1], [0, 0, 0, 1, 1, 1], [0], [0]>} : vector<1x16x8xf32>, vector<1x4x8xf32>, vector<1x16x4xf32> -> vector<1x16x4xf32>
    "tpu.trace_stop"() : () -> ()
    %cst_16 = arith.constant 14.7030163 : f32
    %36 = vector.broadcast %cst_16 : f32 to vector<1x1x4xf32>
    %37 = arith.addf %36, %32 : vector<1x1x4xf32>
    %38 = vector.broadcast %37 : vector<1x1x4xf32> to vector<1x16x4xf32>
    %39 = arith.addf %38, %33 : vector<1x16x4xf32>
    %cst_17 = arith.constant 2.000000e+00 : f32
    %40 = vector.broadcast %cst_17 : f32 to vector<1x16x4xf32>
    %41 = arith.mulf %40, %35 : vector<1x16x4xf32>
    %42 = arith.subf %39, %41 : vector<1x16x4xf32>
    %cst_18 = arith.constant -5.000000e-01 : f32
    %43 = vector.broadcast %cst_18 : f32 to vector<1x16x4xf32>
    %44 = arith.mulf %43, %42 : vector<1x16x4xf32>
    %45 = vector.broadcast %20 : vector<1x1x4xf32> to vector<1x16x4xf32>
    %46 = arith.addf %44, %45 : vector<1x16x4xf32>
    %cst_19 = arith.constant dense<0xFF800000> : vector<1x16xf32>
    %47 = vector.multi_reduction <maximumf>, %46, %cst_19 [2] : vector<1x16x4xf32> to vector<1x16xf32>
    %48 = vector.shape_cast %47 : vector<1x16xf32> to vector<1x16x1xf32>
    %49 = vector.broadcast %48 : vector<1x16x1xf32> to vector<1x16x4xf32>
    %50 = arith.subf %46, %49 : vector<1x16x4xf32>
    %51 = math.exp %50 : vector<1x16x4xf32>
    %cst_20 = arith.constant dense<0.000000e+00> : vector<1x16xf32>
    %52 = vector.multi_reduction <add>, %51, %cst_20 [2] : vector<1x16x4xf32> to vector<1x16xf32>
    %53 = vector.shape_cast %52 : vector<1x16xf32> to vector<1x16x1xf32>
    %54 = tpu.reciprocal %53 {approx = true} : vector<1x16x1xf32> -> vector<1x16x1xf32>
    %55 = arith.mulf %53, %54 : vector<1x16x1xf32>
    %cst_21 = arith.constant 2.000000e+00 : f32
    %56 = vector.broadcast %cst_21 : f32 to vector<1x16x1xf32>
    %57 = arith.subf %56, %55 : vector<1x16x1xf32>
    %58 = arith.mulf %54, %57 : vector<1x16x1xf32>
    %59 = vector.broadcast %58 : vector<1x16x1xf32> to vector<1x16x4xf32>
    %60 = arith.mulf %51, %59 : vector<1x16x4xf32>
    "tpu.trace_start"() <{level = 10 : i32, message = "bnp,bnk->bpk"}> : () -> ()
    %cst_22 = arith.constant dense<0.000000e+00> : vector<1x4x1xf32>
    %61 = tpu.matmul %60, %2, %cst_22 {dimension_numbers = #tpu.dot_dimension_numbers<[1], [1], [2], [2], [0, 0, 0, 2, 1, 2], [0], [0]>} : vector<1x16x4xf32>, vector<1x16x1xf32>, vector<1x4x1xf32> -> vector<1x4x1xf32>
    "tpu.trace_stop"() : () -> ()
    "tpu.trace_start"() <{level = 10 : i32, message = "bnp,bnd->bpd"}> : () -> ()
    %cst_23 = arith.constant dense<0.000000e+00> : vector<1x4x8xf32>
    %62 = tpu.matmul %60, %0, %cst_23 {dimension_numbers = #tpu.dot_dimension_numbers<[1], [1], [2], [2], [0, 0, 0, 2, 1, 2], [0], [0]>} : vector<1x16x4xf32>, vector<1x16x8xf32>, vector<1x4x8xf32> -> vector<1x4x8xf32>
    %cst_24 = arith.constant dense<0.000000e+00> : vector<1x4x8xf32>
    %63 = tpu.matmul %60, %1, %cst_24 {dimension_numbers = #tpu.dot_dimension_numbers<[1], [1], [2], [2], [0, 0, 0, 2, 1, 2], [0], [0]>} : vector<1x16x4xf32>, vector<1x16x8xf32>, vector<1x4x8xf32> -> vector<1x4x8xf32>
    "tpu.trace_stop"() : () -> ()
    %cst_25 = arith.constant 1.000000e+00 : f32
    %64 = vector.broadcast %cst_25 : f32 to vector<1x4x1xf32>
    %65 = arith.addf %61, %64 : vector<1x4x1xf32>
    %66 = tpu.reciprocal %65 {approx = true} : vector<1x4x1xf32> -> vector<1x4x1xf32>
    %67 = arith.mulf %65, %66 : vector<1x4x1xf32>
    %cst_26 = arith.constant 2.000000e+00 : f32
    %68 = vector.broadcast %cst_26 : f32 to vector<1x4x1xf32>
    %69 = arith.subf %68, %67 : vector<1x4x1xf32>
    %70 = arith.mulf %66, %69 : vector<1x4x1xf32>
    %71 = vector.shape_cast %15 : vector<4x8xf32> to vector<1x4x8xf32>
    %72 = arith.addf %62, %71 : vector<1x4x8xf32>
    %73 = vector.broadcast %70 : vector<1x4x1xf32> to vector<1x4x8xf32>
    %74 = arith.mulf %72, %73 : vector<1x4x8xf32>
    %75 = vector.shape_cast %19 : vector<4x8xf32> to vector<1x4x8xf32>
    %76 = arith.addf %63, %75 : vector<1x4x8xf32>
    %77 = vector.broadcast %70 : vector<1x4x1xf32> to vector<1x4x8xf32>
    %78 = arith.mulf %76, %77 : vector<1x4x8xf32>
    %79 = arith.mulf %74, %74 : vector<1x4x8xf32>
    %80 = arith.subf %78, %79 : vector<1x4x8xf32>
    %cst_27 = arith.constant 9.99999968E-21 : f32
    %81 = vector.broadcast %cst_27 : f32 to vector<1x4x8xf32>
    %82 = arith.maximumf %80, %81 : vector<1x4x8xf32>
    %cst_28 = arith.constant dense<0.000000e+00> : vector<1x4xf32>
    %83 = vector.multi_reduction <add>, %60, %cst_28 [1] : vector<1x16x4xf32> to vector<1x4xf32>
    %84 = vector.shape_cast %83 : vector<1x4xf32> to vector<1x1x4xf32>
    %cst_29 = arith.constant 1.000000e+00 : f32
    %85 = vector.broadcast %cst_29 : f32 to vector<1x1x4xf32>
    %86 = arith.addf %84, %85 : vector<1x1x4xf32>
    %cst_30 = arith.constant dense<0.000000e+00> : vector<1x1xf32>
    %87 = vector.multi_reduction <add>, %86, %cst_30 [2] : vector<1x1x4xf32> to vector<1x1xf32>
    %88 = vector.shape_cast %87 : vector<1x1xf32> to vector<1x1x1xf32>
    %89 = tpu.reciprocal %88 {approx = true} : vector<1x1x1xf32> -> vector<1x1x1xf32>
    %90 = arith.mulf %88, %89 : vector<1x1x1xf32>
    %cst_31 = arith.constant 2.000000e+00 : f32
    %91 = vector.broadcast %cst_31 : f32 to vector<1x1x1xf32>
    %92 = arith.subf %91, %90 : vector<1x1x1xf32>
    %93 = arith.mulf %89, %92 : vector<1x1x1xf32>
    %94 = vector.broadcast %93 : vector<1x1x1xf32> to vector<1x1x4xf32>
    %95 = arith.mulf %86, %94 : vector<1x1x4xf32>
    %96 = math.log %95 : vector<1x1x4xf32>
    %97 = tpu.reciprocal %82 {approx = true} : vector<1x4x8xf32> -> vector<1x4x8xf32>
    %98 = arith.mulf %82, %97 : vector<1x4x8xf32>
    %cst_32 = arith.constant 2.000000e+00 : f32
    %99 = vector.broadcast %cst_32 : f32 to vector<1x4x8xf32>
    %100 = arith.subf %99, %98 : vector<1x4x8xf32>
    %101 = arith.mulf %97, %100 : vector<1x4x8xf32>
    %102 = math.log %82 : vector<1x4x8xf32>
    %103 = arith.mulf %74, %74 : vector<1x4x8xf32>
    %104 = arith.mulf %103, %101 : vector<1x4x8xf32>
    %105 = arith.addf %102, %104 : vector<1x4x8xf32>
    "tpu.trace_start"() <{level = 10 : i32, message = "bkd,bpd->bkp"}> : () -> ()
    %cst_33 = arith.constant dense<0.000000e+00> : vector<1x1x4xf32>
    %106 = tpu.matmul %3, %105, %cst_33 {dimension_numbers = #tpu.dot_dimension_numbers<[2], [2], [1], [1], [0, 0, 0, 1, 1, 1], [0], [0]>} : vector<1x1x8xf32>, vector<1x4x8xf32>, vector<1x1x4xf32> -> vector<1x1x4xf32>
    "tpu.trace_stop"() : () -> ()
    "tpu.trace_start"() <{level = 10 : i32, message = "bnd,bpd->bnp"}> : () -> ()
    %cst_34 = arith.constant dense<0.000000e+00> : vector<1x16x4xf32>
    %107 = tpu.matmul %1, %101, %cst_34 {dimension_numbers = #tpu.dot_dimension_numbers<[2], [2], [1], [1], [0, 0, 0, 1, 1, 1], [0], [0]>} : vector<1x16x8xf32>, vector<1x4x8xf32>, vector<1x16x4xf32> -> vector<1x16x4xf32>
    "tpu.trace_stop"() : () -> ()
    %108 = arith.mulf %74, %101 : vector<1x4x8xf32>
    "tpu.trace_start"() <{level = 10 : i32, message = "bnd,bpd->bnp"}> : () -> ()
    %cst_35 = arith.constant dense<0.000000e+00> : vector<1x16x4xf32>
    %109 = tpu.matmul %0, %108, %cst_35 {dimension_numbers = #tpu.dot_dimension_numbers<[2], [2], [1], [1], [0, 0, 0, 1, 1, 1], [0], [0]>} : vector<1x16x8xf32>, vector<1x4x8xf32>, vector<1x16x4xf32> -> vector<1x16x4xf32>
    "tpu.trace_stop"() : () -> ()
    %cst_36 = arith.constant 14.7030163 : f32
    %110 = vector.broadcast %cst_36 : f32 to vector<1x1x4xf32>
    %111 = arith.addf %110, %106 : vector<1x1x4xf32>
    %112 = vector.broadcast %111 : vector<1x1x4xf32> to vector<1x16x4xf32>
    %113 = arith.addf %112, %107 : vector<1x16x4xf32>
    %cst_37 = arith.constant 2.000000e+00 : f32
    %114 = vector.broadcast %cst_37 : f32 to vector<1x16x4xf32>
    %115 = arith.mulf %114, %109 : vector<1x16x4xf32>
    %116 = arith.subf %113, %115 : vector<1x16x4xf32>
    %cst_38 = arith.constant -5.000000e-01 : f32
    %117 = vector.broadcast %cst_38 : f32 to vector<1x16x4xf32>
    %118 = arith.mulf %117, %116 : vector<1x16x4xf32>
    %119 = vector.broadcast %96 : vector<1x1x4xf32> to vector<1x16x4xf32>
    %120 = arith.addf %118, %119 : vector<1x16x4xf32>
    %cst_39 = arith.constant dense<0xFF800000> : vector<1x16xf32>
    %121 = vector.multi_reduction <maximumf>, %120, %cst_39 [2] : vector<1x16x4xf32> to vector<1x16xf32>
    %122 = vector.shape_cast %121 : vector<1x16xf32> to vector<1x16x1xf32>
    %123 = vector.broadcast %122 : vector<1x16x1xf32> to vector<1x16x4xf32>
    %124 = arith.subf %120, %123 : vector<1x16x4xf32>
    %125 = math.exp %124 : vector<1x16x4xf32>
    %cst_40 = arith.constant dense<0.000000e+00> : vector<1x16xf32>
    %126 = vector.multi_reduction <add>, %125, %cst_40 [2] : vector<1x16x4xf32> to vector<1x16xf32>
    %127 = vector.shape_cast %126 : vector<1x16xf32> to vector<1x16x1xf32>
    %128 = tpu.reciprocal %127 {approx = true} : vector<1x16x1xf32> -> vector<1x16x1xf32>
    %129 = arith.mulf %127, %128 : vector<1x16x1xf32>
    %cst_41 = arith.constant 2.000000e+00 : f32
    %130 = vector.broadcast %cst_41 : f32 to vector<1x16x1xf32>
    %131 = arith.subf %130, %129 : vector<1x16x1xf32>
    %132 = arith.mulf %128, %131 : vector<1x16x1xf32>
    %133 = vector.broadcast %132 : vector<1x16x1xf32> to vector<1x16x4xf32>
    %134 = arith.mulf %125, %133 : vector<1x16x4xf32>
    "tpu.trace_start"() <{level = 10 : i32, message = "bnp,bnk->bpk"}> : () -> ()
    %cst_42 = arith.constant dense<0.000000e+00> : vector<1x4x1xf32>
    %135 = tpu.matmul %134, %2, %cst_42 {dimension_numbers = #tpu.dot_dimension_numbers<[1], [1], [2], [2], [0, 0, 0, 2, 1, 2], [0], [0]>} : vector<1x16x4xf32>, vector<1x16x1xf32>, vector<1x4x1xf32> -> vector<1x4x1xf32>
    "tpu.trace_stop"() : () -> ()
    "tpu.trace_start"() <{level = 10 : i32, message = "bnp,bnd->bpd"}> : () -> ()
    %cst_43 = arith.constant dense<0.000000e+00> : vector<1x4x8xf32>
    %136 = tpu.matmul %134, %0, %cst_43 {dimension_numbers = #tpu.dot_dimension_numbers<[1], [1], [2], [2], [0, 0, 0, 2, 1, 2], [0], [0]>} : vector<1x16x4xf32>, vector<1x16x8xf32>, vector<1x4x8xf32> -> vector<1x4x8xf32>
    %cst_44 = arith.constant dense<0.000000e+00> : vector<1x4x8xf32>
    %137 = tpu.matmul %134, %1, %cst_44 {dimension_numbers = #tpu.dot_dimension_numbers<[1], [1], [2], [2], [0, 0, 0, 2, 1, 2], [0], [0]>} : vector<1x16x4xf32>, vector<1x16x8xf32>, vector<1x4x8xf32> -> vector<1x4x8xf32>
    "tpu.trace_stop"() : () -> ()
    %cst_45 = arith.constant 1.000000e+00 : f32
    %138 = vector.broadcast %cst_45 : f32 to vector<1x4x1xf32>
    %139 = arith.addf %135, %138 : vector<1x4x1xf32>
    %140 = tpu.reciprocal %139 {approx = true} : vector<1x4x1xf32> -> vector<1x4x1xf32>
    %141 = arith.mulf %139, %140 : vector<1x4x1xf32>
    %cst_46 = arith.constant 2.000000e+00 : f32
    %142 = vector.broadcast %cst_46 : f32 to vector<1x4x1xf32>
    %143 = arith.subf %142, %141 : vector<1x4x1xf32>
    %144 = arith.mulf %140, %143 : vector<1x4x1xf32>
    %145 = vector.shape_cast %15 : vector<4x8xf32> to vector<1x4x8xf32>
    %146 = arith.addf %136, %145 : vector<1x4x8xf32>
    %147 = vector.broadcast %144 : vector<1x4x1xf32> to vector<1x4x8xf32>
    %148 = arith.mulf %146, %147 : vector<1x4x8xf32>
    %149 = vector.shape_cast %19 : vector<4x8xf32> to vector<1x4x8xf32>
    %150 = arith.addf %137, %149 : vector<1x4x8xf32>
    %151 = vector.broadcast %144 : vector<1x4x1xf32> to vector<1x4x8xf32>
    %152 = arith.mulf %150, %151 : vector<1x4x8xf32>
    %153 = arith.mulf %148, %148 : vector<1x4x8xf32>
    %154 = arith.subf %152, %153 : vector<1x4x8xf32>
    %cst_47 = arith.constant 9.99999968E-21 : f32
    %155 = vector.broadcast %cst_47 : f32 to vector<1x4x8xf32>
    %156 = arith.maximumf %154, %155 : vector<1x4x8xf32>
    %cst_48 = arith.constant dense<0.000000e+00> : vector<1x4xf32>
    %157 = vector.multi_reduction <add>, %134, %cst_48 [1] : vector<1x16x4xf32> to vector<1x4xf32>
    %158 = vector.shape_cast %157 : vector<1x4xf32> to vector<1x1x4xf32>
    %cst_49 = arith.constant 1.000000e+00 : f32
    %159 = vector.broadcast %cst_49 : f32 to vector<1x1x4xf32>
    %160 = arith.addf %158, %159 : vector<1x1x4xf32>
    %cst_50 = arith.constant dense<0.000000e+00> : vector<1x1xf32>
    %161 = vector.multi_reduction <add>, %160, %cst_50 [2] : vector<1x1x4xf32> to vector<1x1xf32>
    %162 = vector.shape_cast %161 : vector<1x1xf32> to vector<1x1x1xf32>
    %163 = tpu.reciprocal %162 {approx = true} : vector<1x1x1xf32> -> vector<1x1x1xf32>
    %164 = arith.mulf %162, %163 : vector<1x1x1xf32>
    %cst_51 = arith.constant 2.000000e+00 : f32
    %165 = vector.broadcast %cst_51 : f32 to vector<1x1x1xf32>
    %166 = arith.subf %165, %164 : vector<1x1x1xf32>
    %167 = arith.mulf %163, %166 : vector<1x1x1xf32>
    %168 = vector.broadcast %167 : vector<1x1x1xf32> to vector<1x1x4xf32>
    %169 = arith.mulf %160, %168 : vector<1x1x4xf32>
    %170 = math.log %169 : vector<1x1x4xf32>
    %171 = tpu.reciprocal %156 {approx = true} : vector<1x4x8xf32> -> vector<1x4x8xf32>
    %172 = arith.mulf %156, %171 : vector<1x4x8xf32>
    %cst_52 = arith.constant 2.000000e+00 : f32
    %173 = vector.broadcast %cst_52 : f32 to vector<1x4x8xf32>
    %174 = arith.subf %173, %172 : vector<1x4x8xf32>
    %175 = arith.mulf %171, %174 : vector<1x4x8xf32>
    %176 = math.log %156 : vector<1x4x8xf32>
    %177 = arith.mulf %148, %148 : vector<1x4x8xf32>
    %178 = arith.mulf %177, %175 : vector<1x4x8xf32>
    %179 = arith.addf %176, %178 : vector<1x4x8xf32>
    "tpu.trace_start"() <{level = 10 : i32, message = "bkd,bpd->bkp"}> : () -> ()
    %cst_53 = arith.constant dense<0.000000e+00> : vector<1x1x4xf32>
    %180 = tpu.matmul %3, %179, %cst_53 {dimension_numbers = #tpu.dot_dimension_numbers<[2], [2], [1], [1], [0, 0, 0, 1, 1, 1], [0], [0]>} : vector<1x1x8xf32>, vector<1x4x8xf32>, vector<1x1x4xf32> -> vector<1x1x4xf32>
    "tpu.trace_stop"() : () -> ()
    "tpu.trace_start"() <{level = 10 : i32, message = "bnd,bpd->bnp"}> : () -> ()
    %cst_54 = arith.constant dense<0.000000e+00> : vector<1x16x4xf32>
    %181 = tpu.matmul %1, %175, %cst_54 {dimension_numbers = #tpu.dot_dimension_numbers<[2], [2], [1], [1], [0, 0, 0, 1, 1, 1], [0], [0]>} : vector<1x16x8xf32>, vector<1x4x8xf32>, vector<1x16x4xf32> -> vector<1x16x4xf32>
    "tpu.trace_stop"() : () -> ()
    %182 = arith.mulf %148, %175 : vector<1x4x8xf32>
    "tpu.trace_start"() <{level = 10 : i32, message = "bnd,bpd->bnp"}> : () -> ()
    %cst_55 = arith.constant dense<0.000000e+00> : vector<1x16x4xf32>
    %183 = tpu.matmul %0, %182, %cst_55 {dimension_numbers = #tpu.dot_dimension_numbers<[2], [2], [1], [1], [0, 0, 0, 1, 1, 1], [0], [0]>} : vector<1x16x8xf32>, vector<1x4x8xf32>, vector<1x16x4xf32> -> vector<1x16x4xf32>
    "tpu.trace_stop"() : () -> ()
    %cst_56 = arith.constant 14.7030163 : f32
    %184 = vector.broadcast %cst_56 : f32 to vector<1x1x4xf32>
    %185 = arith.addf %184, %180 : vector<1x1x4xf32>
    %186 = vector.broadcast %185 : vector<1x1x4xf32> to vector<1x16x4xf32>
    %187 = arith.addf %186, %181 : vector<1x16x4xf32>
    %cst_57 = arith.constant 2.000000e+00 : f32
    %188 = vector.broadcast %cst_57 : f32 to vector<1x16x4xf32>
    %189 = arith.mulf %188, %183 : vector<1x16x4xf32>
    %190 = arith.subf %187, %189 : vector<1x16x4xf32>
    %cst_58 = arith.constant -5.000000e-01 : f32
    %191 = vector.broadcast %cst_58 : f32 to vector<1x16x4xf32>
    %192 = arith.mulf %191, %190 : vector<1x16x4xf32>
    %193 = vector.broadcast %170 : vector<1x1x4xf32> to vector<1x16x4xf32>
    %194 = arith.addf %192, %193 : vector<1x16x4xf32>
    %cst_59 = arith.constant dense<0xFF800000> : vector<1x16xf32>
    %195 = vector.multi_reduction <maximumf>, %194, %cst_59 [2] : vector<1x16x4xf32> to vector<1x16xf32>
    %196 = vector.shape_cast %195 : vector<1x16xf32> to vector<1x16x1xf32>
    %197 = vector.broadcast %196 : vector<1x16x1xf32> to vector<1x16x4xf32>
    %198 = arith.subf %194, %197 : vector<1x16x4xf32>
    %199 = math.exp %198 : vector<1x16x4xf32>
    %cst_60 = arith.constant dense<0.000000e+00> : vector<1x16xf32>
    %200 = vector.multi_reduction <add>, %199, %cst_60 [2] : vector<1x16x4xf32> to vector<1x16xf32>
    %201 = vector.shape_cast %200 : vector<1x16xf32> to vector<1x16x1xf32>
    %202 = tpu.reciprocal %201 {approx = true} : vector<1x16x1xf32> -> vector<1x16x1xf32>
    %203 = arith.mulf %201, %202 : vector<1x16x1xf32>
    %cst_61 = arith.constant 2.000000e+00 : f32
    %204 = vector.broadcast %cst_61 : f32 to vector<1x16x1xf32>
    %205 = arith.subf %204, %203 : vector<1x16x1xf32>
    %206 = arith.mulf %202, %205 : vector<1x16x1xf32>
    %207 = vector.broadcast %206 : vector<1x16x1xf32> to vector<1x16x4xf32>
    %208 = arith.mulf %199, %207 : vector<1x16x4xf32>
    "tpu.trace_start"() <{level = 10 : i32, message = "bnp,bnk->bpk"}> : () -> ()
    %cst_62 = arith.constant dense<0.000000e+00> : vector<1x4x1xf32>
    %209 = tpu.matmul %208, %2, %cst_62 {dimension_numbers = #tpu.dot_dimension_numbers<[1], [1], [2], [2], [0, 0, 0, 2, 1, 2], [0], [0]>} : vector<1x16x4xf32>, vector<1x16x1xf32>, vector<1x4x1xf32> -> vector<1x4x1xf32>
    "tpu.trace_stop"() : () -> ()
    "tpu.trace_start"() <{level = 10 : i32, message = "bnp,bnd->bpd"}> : () -> ()
    %cst_63 = arith.constant dense<0.000000e+00> : vector<1x4x8xf32>
    %210 = tpu.matmul %208, %0, %cst_63 {dimension_numbers = #tpu.dot_dimension_numbers<[1], [1], [2], [2], [0, 0, 0, 2, 1, 2], [0], [0]>} : vector<1x16x4xf32>, vector<1x16x8xf32>, vector<1x4x8xf32> -> vector<1x4x8xf32>
    %cst_64 = arith.constant dense<0.000000e+00> : vector<1x4x8xf32>
    %211 = tpu.matmul %208, %1, %cst_64 {dimension_numbers = #tpu.dot_dimension_numbers<[1], [1], [2], [2], [0, 0, 0, 2, 1, 2], [0], [0]>} : vector<1x16x4xf32>, vector<1x16x8xf32>, vector<1x4x8xf32> -> vector<1x4x8xf32>
    "tpu.trace_stop"() : () -> ()
    %cst_65 = arith.constant 1.000000e+00 : f32
    %212 = vector.broadcast %cst_65 : f32 to vector<1x4x1xf32>
    %213 = arith.addf %209, %212 : vector<1x4x1xf32>
    %214 = tpu.reciprocal %213 {approx = true} : vector<1x4x1xf32> -> vector<1x4x1xf32>
    %215 = arith.mulf %213, %214 : vector<1x4x1xf32>
    %cst_66 = arith.constant 2.000000e+00 : f32
    %216 = vector.broadcast %cst_66 : f32 to vector<1x4x1xf32>
    %217 = arith.subf %216, %215 : vector<1x4x1xf32>
    %218 = arith.mulf %214, %217 : vector<1x4x1xf32>
    %219 = vector.shape_cast %15 : vector<4x8xf32> to vector<1x4x8xf32>
    %220 = arith.addf %210, %219 : vector<1x4x8xf32>
    %221 = vector.broadcast %218 : vector<1x4x1xf32> to vector<1x4x8xf32>
    %222 = arith.mulf %220, %221 : vector<1x4x8xf32>
    %223 = vector.shape_cast %19 : vector<4x8xf32> to vector<1x4x8xf32>
    %224 = arith.addf %211, %223 : vector<1x4x8xf32>
    %225 = vector.broadcast %218 : vector<1x4x1xf32> to vector<1x4x8xf32>
    %226 = arith.mulf %224, %225 : vector<1x4x8xf32>
    %227 = arith.mulf %222, %222 : vector<1x4x8xf32>
    %228 = arith.subf %226, %227 : vector<1x4x8xf32>
    %cst_67 = arith.constant 9.99999968E-21 : f32
    %229 = vector.broadcast %cst_67 : f32 to vector<1x4x8xf32>
    %230 = arith.maximumf %228, %229 : vector<1x4x8xf32>
    %cst_68 = arith.constant dense<0.000000e+00> : vector<1x4xf32>
    %231 = vector.multi_reduction <add>, %208, %cst_68 [1] : vector<1x16x4xf32> to vector<1x4xf32>
    %232 = vector.shape_cast %231 : vector<1x4xf32> to vector<1x1x4xf32>
    %cst_69 = arith.constant 1.000000e+00 : f32
    %233 = vector.broadcast %cst_69 : f32 to vector<1x1x4xf32>
    %234 = arith.addf %232, %233 : vector<1x1x4xf32>
    %cst_70 = arith.constant dense<0.000000e+00> : vector<1x1xf32>
    %235 = vector.multi_reduction <add>, %234, %cst_70 [2] : vector<1x1x4xf32> to vector<1x1xf32>
    %236 = vector.shape_cast %235 : vector<1x1xf32> to vector<1x1x1xf32>
    %237 = tpu.reciprocal %236 {approx = true} : vector<1x1x1xf32> -> vector<1x1x1xf32>
    %238 = arith.mulf %236, %237 : vector<1x1x1xf32>
    %cst_71 = arith.constant 2.000000e+00 : f32
    %239 = vector.broadcast %cst_71 : f32 to vector<1x1x1xf32>
    %240 = arith.subf %239, %238 : vector<1x1x1xf32>
    %241 = arith.mulf %237, %240 : vector<1x1x1xf32>
    %242 = vector.broadcast %241 : vector<1x1x1xf32> to vector<1x1x4xf32>
    %243 = arith.mulf %234, %242 : vector<1x1x4xf32>
    %c0_72 = arith.constant 0 : index
    %c0_73 = arith.constant 0 : index
    %c0_74 = arith.constant 0 : index
    %244 = vector.load %arg4[%c0_72, %c0_73, %c0_74] : memref<1x1x4xf32, #tpu.memory_space<vmem>>, vector<1x1x4xf32>
    tpu.vector_store %arg4[%c0_72, %c0_73, %c0_74], %243 {strides = array<i32>} : memref<1x1x4xf32, #tpu.memory_space<vmem>>, vector<1x1x4xf32>,
    %c0_75 = arith.constant 0 : index
    %c0_76 = arith.constant 0 : index
    %c0_77 = arith.constant 0 : index
    %245 = vector.load %arg5[%c0_75, %c0_76, %c0_77] : memref<1x4x8xf32, #tpu.memory_space<vmem>>, vector<1x4x8xf32>
    tpu.vector_store %arg5[%c0_75, %c0_76, %c0_77], %222 {strides = array<i32>} : memref<1x4x8xf32, #tpu.memory_space<vmem>>, vector<1x4x8xf32>,
    %c0_78 = arith.constant 0 : index
    %c0_79 = arith.constant 0 : index
    %c0_80 = arith.constant 0 : index
    %246 = vector.load %arg6[%c0_78, %c0_79, %c0_80] : memref<1x4x8xf32, #tpu.memory_space<vmem>>, vector<1x4x8xf32>
    tpu.vector_store %arg6[%c0_78, %c0_79, %c0_80], %230 {strides = array<i32>} : memref<1x4x8xf32, #tpu.memory_space<vmem>>, vector<1x4x8xf32>,
    return
  }
  func.func @transform_0(%arg0: i32) -> (i32, i32, i32) {
    %c0_i32 = arith.constant 0 : i32
    %c0_i32_0 = arith.constant 0 : i32
    %c0_i32_1 = arith.constant 0 : i32
    return %arg0, %c0_i32, %c0_i32_0 : i32, i32, i32
  }
  func.func @transform_1(%arg0: i32) -> (i32, i32) {
    %c0_i32 = arith.constant 0 : i32
    %c0_i32_0 = arith.constant 0 : i32
    %c0_i32_1 = arith.constant 0 : i32
    return %c0_i32, %c0_i32_0 : i32, i32
  }
  func.func @transform_2(%arg0: i32) -> (i32, i32) {
    %c0_i32 = arith.constant 0 : i32
    %c0_i32_0 = arith.constant 0 : i32
    %c0_i32_1 = arith.constant 0 : i32
    return %c0_i32, %c0_i32_0 : i32, i32
  }
  func.func @transform_3(%arg0: i32) -> (i32, i32, i32) {
    %c0_i32 = arith.constant 0 : i32
    %c0_i32_0 = arith.constant 0 : i32
    %c0_i32_1 = arith.constant 0 : i32
    return %arg0, %c0_i32, %c0_i32_0 : i32, i32, i32
  }
  func.func @transform_4(%arg0: i32) -> (i32, i32, i32) {
    %c0_i32 = arith.constant 0 : i32
    %c0_i32_0 = arith.constant 0 : i32
    %c0_i32_1 = arith.constant 0 : i32
    return %arg0, %c0_i32, %c0_i32_0 : i32, i32, i32
  }
  func.func @transform_5(%arg0: i32) -> (i32, i32, i32) {
    %c0_i32 = arith.constant 0 : i32
    %c0_i32_0 = arith.constant 0 : i32
    %c0_i32_1 = arith.constant 0 : i32
    return %arg0, %c0_i32, %c0_i32_0 : i32, i32, i32
  }
}

</mosaic_0001>

<llo_original>
// kernel: tpu_custom_call.1
$region0: #{tpu_custom_call.1}
  #allocation0 [shape = 'u32[]', space=smem, size = 0x4, offset = 0x4, fixed_abs, tag = 'smem constant byte address 0x4 - core index']
  #allocation1 [shape = 'u32[72,128]{1,0:T(1,128)}', space=vmem, size = 0x9000, scoped, tag = 'internal scratch']
  %s0 = inlined_call_operand.vmem [shape: f32[2,16,8], index: 0, kind: input, shape index: {}]
  %s1 = inlined_call_operand.vmem [shape: f32[4,8], index: 1, kind: input, shape index: {}]
  %s2 = inlined_call_operand.vmem [shape: f32[4,8], index: 2, kind: input, shape index: {}]
  %s3 = inlined_call_operand.hbm [shape: f32[2,1,4], index: 3, kind: output, shape index: {0}]
  %s4 = inlined_call_operand.hbm [shape: f32[2,4,8], index: 4, kind: output, shape index: {1}]
  %s5 = inlined_call_operand.hbm [shape: f32[2,4,8], index: 5, kind: output, shape index: {2}]
  %6 = xla_tuple %s3, %s4, %s5
  %s7 = sld [smem:[#allocation0]]
  $region61: #{tpu_custom_call.1} parent=0
    _
  %s9 = ssub.s32 1, %s7
  %s10 = scalar_select 0, %s9, %s7
  $region1: #{tpu_custom_call.1} parent=0
    #allocation2 [shape = 'u8[1024]{0}', space=vmem, size = 0x400, scoped, tag = 'output window, operand 0']
    #allocation3 [shape = 's32[2]{0}', space=sflag, size = 0x8, scoped, tag = 'scoped memory for tpu_custom_call.1']
    #allocation4 [shape = 'u8[4096]{0}', space=vmem, size = 0x1000, scoped, tag = 'output window, operand 1']
    #allocation5 [shape = 's32[2]{0}', space=sflag, size = 0x8, scoped, tag = 'scoped memory for tpu_custom_call.1']
    #allocation6 [shape = 'u8[4096]{0}', space=vmem, size = 0x1000, scoped, tag = 'output window, operand 2']
    %11 = vsyncpa [#allocation3], 0
    %s12 = scalar_lea.sflag [#allocation3], 1
    %13 = vsyncpa %s12, 0
    %14 = vsyncpa [#allocation5], 0
    %s15 = scalar_lea.sflag [#allocation5], 1
    %16 = vsyncpa %s15, 0
    loop: start=0, step=1, limit=4
    $region2: #{tpu_custom_call.1} parent=1 // loop_pre_header
      _
    $region3: #{tpu_custom_call.1} parent=1 // loop_header
      %s18 = sphi 0, %s22
      %p19 = scmp.ge.s32.totalorder %s18, 4
      %s28 = sphi 0, %s30
      %s31 = sphi 0, %s28
      %s32 = sphi 0, %s31
      %s48 = sphi 0, %s32
      %s52 = sphi 0, %s52
      %s54 = sphi 0, %s52
      %s55 = sphi 0, %s54
      %s69 = sphi 0, %s55
      %s73 = sphi 0, %s73
      %s75 = sphi 0, %s73
      %s76 = sphi 0, %s75
      %s90 = sphi 0, %s76
      %s96 = sphi 0, %s98
      %s99 = sphi 0, %s96
      %s100 = sphi 0, %s99
      %s116 = sphi 0, %s100
      %s122 = sphi 0, %s124
      %s125 = sphi 0, %s122
      %s126 = sphi 0, %s125
      %s142 = sphi 0, %s126
      %s148 = sphi 0, %s150
      %s151 = sphi 0, %s148
      %s152 = sphi 0, %s151
      %s168 = sphi 0, %s152
    $region4: #{tpu_custom_call.1} parent=1 // loop_header_branch
      %21 = sbr.rel (%p19) target = $region8
    $region5: #{tpu_custom_call.1} parent=1 // loop_body
      %s23 = ssub.s32 %s18, 1
      %s24 = ssub.s32 %s18, 2
      %s25 = sadd.s32 %s18, 1
      %s26 = ssub.s32 %s18, %s25
      %p27 = scmp.eq.s32.totalorder %s26, 0
      %s29 = sadd.s32 %s28, 1
      %s30 = scalar_select %p27, %s28, %s29
      %p33 = pneg %p27
      %p34 = scmp.eq.s32.totalorder %s18, 1
      %p35 = por %p33, %p34
      %p36 = scmp.ne.s32.totalorder %s28, %s31
      %p37 = scmp.eq.s32.totalorder %s18, 0
      %p38 = por %p36, %p37
      %p39 = scmp.ne.s32.totalorder %s28, %s31
      %p40 = scmp.eq.s32.totalorder %s23, 1
      %p41 = por %p39, %p40
      %p42 = scmp.ne.s32.totalorder %s31, %s32
      %p43 = scmp.eq.s32.totalorder %s23, 0
      %p44 = por %p42, %p43
      %p45 = scmp.ne.s32.totalorder %s31, %s32
      %p46 = scmp.eq.s32.totalorder %s24, 1
      %p47 = por %p45, %p46
      %p49 = scmp.ne.s32.totalorder %s32, %s48
      %p50 = scmp.eq.s32.totalorder %s24, 0
      %p51 = por %p49, %p50
      %s53 = sadd.s32 %s52, 1
      %p56 = scmp.eq.s32.totalorder %s18, 1
      %p57 = scmp.ne.s32.totalorder %s52, %s54
      %p58 = scmp.eq.s32.totalorder %s18, 0
      %p59 = por %p57, %p58
      %p60 = scmp.ne.s32.totalorder %s52, %s54
      %p61 = scmp.eq.s32.totalorder %s23, 1
      %p62 = por %p60, %p61
      %p63 = scmp.ne.s32.totalorder %s54, %s55
      %p64 = scmp.eq.s32.totalorder %s23, 0
      %p65 = por %p63, %p64
      %p66 = scmp.ne.s32.totalorder %s54, %s55
      %p67 = scmp.eq.s32.totalorder %s24, 1
      %p68 = por %p66, %p67
      %p70 = scmp.ne.s32.totalorder %s55, %s69
      %p71 = scmp.eq.s32.totalorder %s24, 0
      %p72 = por %p70, %p71
      %s74 = sadd.s32 %s73, 1
      %p77 = scmp.eq.s32.totalorder %s18, 1
      %p78 = scmp.ne.s32.totalorder %s73, %s75
      %p79 = scmp.eq.s32.totalorder %s18, 0
      %p80 = por %p78, %p79
      %p81 = scmp.ne.s32.totalorder %s73, %s75
      %p82 = scmp.eq.s32.totalorder %s23, 1
      %p83 = por %p81, %p82
      %p84 = scmp.ne.s32.totalorder %s75, %s76
      %p85 = scmp.eq.s32.totalorder %s23, 0
      %p86 = por %p84, %p85
      %p87 = scmp.ne.s32.totalorder %s75, %s76
      %p88 = scmp.eq.s32.totalorder %s24, 1
      %p89 = por %p87, %p88
      %p91 = scmp.ne.s32.totalorder %s76, %s90
      %p92 = scmp.eq.s32.totalorder %s24, 0
      %p93 = por %p91, %p92
      %s94 = ssub.s32 %s18, %s25
      %p95 = scmp.eq.s32.totalorder %s94, 0
      %s97 = sadd.s32 %s96, 1
      %s98 = scalar_select %p95, %s96, %s97
      %p101 = pneg %p95
      %p102 = scmp.eq.s32.totalorder %s18, 1
      %p103 = por %p101, %p102
      %p104 = scmp.ne.s32.totalorder %s96, %s99
      %p105 = scmp.eq.s32.totalorder %s18, 0
      %p106 = por %p104, %p105
      %p107 = scmp.ne.s32.totalorder %s96, %s99
      %p108 = scmp.eq.s32.totalorder %s23, 1
      %p109 = por %p107, %p108
      %p110 = scmp.ne.s32.totalorder %s99, %s100
      %p111 = scmp.eq.s32.totalorder %s23, 0
      %p112 = por %p110, %p111
      %p113 = scmp.ne.s32.totalorder %s99, %s100
      %p114 = scmp.eq.s32.totalorder %s24, 1
      %p115 = por %p113, %p114
      %p117 = scmp.ne.s32.totalorder %s100, %s116
      %p118 = scmp.eq.s32.totalorder %s24, 0
      %p119 = por %p117, %p118
      %s120 = ssub.s32 %s18, %s25
      %p121 = scmp.eq.s32.totalorder %s120, 0
      %s123 = sadd.s32 %s122, 1
      %s124 = scalar_select %p121, %s122, %s123
      %p127 = pneg %p121
      %p128 = scmp.eq.s32.totalorder %s18, 1
      %p129 = por %p127, %p128
      %p130 = scmp.ne.s32.totalorder %s122, %s125
      %p131 = scmp.eq.s32.totalorder %s18, 0
      %p132 = por %p130, %p131
      %p133 = scmp.ne.s32.totalorder %s122, %s125
      %p134 = scmp.eq.s32.totalorder %s23, 1
      %p135 = por %p133, %p134
      %p136 = scmp.ne.s32.totalorder %s125, %s126
      %p137 = scmp.eq.s32.totalorder %s23, 0
      %p138 = por %p136, %p137
      %p139 = scmp.ne.s32.totalorder %s125, %s126
      %p140 = scmp.eq.s32.totalorder %s24, 1
      %p141 = por %p139, %p140
      %p143 = scmp.ne.s32.totalorder %s126, %s142
      %p144 = scmp.eq.s32.totalorder %s24, 0
      %p145 = por %p143, %p144
      %s146 = ssub.s32 %s18, %s25
      %p147 = scmp.eq.s32.totalorder %s146, 0
      %s149 = sadd.s32 %s148, 1
      %s150 = scalar_select %p147, %s148, %s149
      %p153 = pneg %p147
      %p154 = scmp.eq.s32.totalorder %s18, 1
      %p155 = por %p153, %p154
      %p156 = scmp.ne.s32.totalorder %s148, %s151
      %p157 = scmp.eq.s32.totalorder %s18, 0
      %p158 = por %p156, %p157
      %p159 = scmp.ne.s32.totalorder %s148, %s151
      %p160 = scmp.eq.s32.totalorder %s23, 1
      %p161 = por %p159, %p160
      %p162 = scmp.ne.s32.totalorder %s151, %s152
      %p163 = scmp.eq.s32.totalorder %s23, 0
      %p164 = por %p162, %p163
      %p165 = scmp.ne.s32.totalorder %s151, %s152
      %p166 = scmp.eq.s32.totalorder %s24, 1
      %p167 = por %p165, %p166
      %p169 = scmp.ne.s32.totalorder %s152, %s168
      %p170 = scmp.eq.s32.totalorder %s24, 0
      %p171 = por %p169, %p170
      %p172 = scmp.le.s32.totalorder 1, %s18
      %p173 = scmp.lt.s32.totalorder %s18, 3
      %p174 = pnand %p172, %p173
      %p175 = pneg %p174
      // Predicated region
      $region9: #{tpu_custom_call.1} parent=5 // pred_check
        _
      $region10: #{tpu_custom_call.1} parent=5 // pred_check_branch
        %177 = sbr.rel (%p174) target = $region12
      $region11: #{tpu_custom_call.1} parent=5 // pred_region
        %s178 = ssub.s32 %s18, 1
        // Predicated region
        $region13: #{tpu_custom_call.1} parent=11 // pred_check
          %p179 = pneg %p65
        $region14: #{tpu_custom_call.1} parent=11 // pred_check_branch
          %181 = sbr.rel (%p179) target = $region16
        $region15: #{tpu_custom_call.1} parent=11 // pred_region
          _
        $region16: #{tpu_custom_call.1} parent=11 // pred_fallthru
          _
        // Predicated region
        $region17: #{tpu_custom_call.1} parent=11 // pred_check
          %p182 = pneg %p86
        $region18: #{tpu_custom_call.1} parent=11 // pred_check_branch
          %184 = sbr.rel (%p182) target = $region20
        $region19: #{tpu_custom_call.1} parent=11 // pred_region
          _
        $region20: #{tpu_custom_call.1} parent=11 // pred_fallthru
          _
      $region12: #{tpu_custom_call.1} parent=5 // pred_fallthru
        _
      %p185 = scmp.lt.s32.totalorder %s18, 2
      // Predicated region
      $region21: #{tpu_custom_call.1} parent=5 // pred_check
        %p186 = pneg %p185
      $region22: #{tpu_custom_call.1} parent=5 // pred_check_branch
        %188 = sbr.rel (%p186) target = $region24
      $region23: #{tpu_custom_call.1} parent=5 // pred_region
        // Predicated region
        $region25: #{tpu_custom_call.1} parent=23 // pred_check
          %p189 = pneg %p38
        $region26: #{tpu_custom_call.1} parent=23 // pred_check_branch
          %191 = sbr.rel (%p189) target = $region28
        $region27: #{tpu_custom_call.1} parent=23 // pred_region
          %p192 = scmp.lt.s32.totalorder %s18, 1
          %s193 = scalar_select %p192, %s18, 1
          %s194 = smul.addr %s193, 2
          %s195 = smul.addr %s194, 8
          %s196 = scalar_lea.vmem %s0, %s195
        $region28: #{tpu_custom_call.1} parent=23 // pred_fallthru
          _
      $region24: #{tpu_custom_call.1} parent=5 // pred_fallthru
        _
      %p197 = scmp.le.s32.totalorder 1, %s18
      %p198 = scmp.lt.s32.totalorder %s18, 3
      %p199 = pnand %p197, %p198
      %p200 = pneg %p199
      // Predicated region
      $region29: #{tpu_custom_call.1} parent=5 // pred_check
        _
      $region30: #{tpu_custom_call.1} parent=5 // pred_check_branch
        %202 = sbr.rel (%p199) target = $region32
      $region31: #{tpu_custom_call.1} parent=5 // pred_region
        %s203 = ssub.s32 %s18, 1
        %p204 = scmp.lt.s32.totalorder %s23, 1
        %s205 = scalar_select %p204, %s23, 1
        %s206 = smul.addr %s205, 2
        %s207 = smul.addr %s206, 8
        %s208 = scalar_lea.vmem %s0, %s207
        %p209 = pneg %p44
        %p210 = pneg %p41
        %p211 = pneg %p65
        %p212 = pneg %p62
        %p213 = pneg %p86
        %p214 = pneg %p83
        %p215 = pneg %p112
        %p216 = pneg %p109
        %s217 = sand.u32 %s99, 1
        %s218 = scalar_lea.sflag [#allocation3], %s217
        %s219 = sand.u32 %s99, 1
        %s220 = scalar_lea.vmem [#allocation2], %s219
        %p221 = pneg %p138
        %p222 = pneg %p135
        %s223 = sand.u32 %s23, 1
        %s224 = scalar_lea.sflag [#allocation5], %s223
        %s225 = sand.u32 %s125, 1
        %s226 = smul.addr %s225, 4
        %s227 = scalar_lea.vmem [#allocation4], %s226
        %p228 = pneg %p164
        %p229 = pneg %p161
        %s230 = sand.u32 %s23, 1
        %s231 = scalar_lea.sflag [#allocation5], %s230
        %s232 = sand.u32 %s151, 1
        %s233 = smul.addr %s232, 4
        %s234 = scalar_lea.vmem [#allocation6], %s233
        %p235 = scmp.lt.s32.totalorder %s23, 1
        %s236 = scalar_select %p235, %s23, 1
        %s237 = smul.addr %s236, 2
        %s238 = smul.addr %s237, 8
        %s239 = scalar_lea.vmem %s0, %s238
        %v240 = vld [vmem:[%s239] sm:$0xff]
        %v241 = vld [vmem:[%s239 + $0x8] sm:$0xff]
        %v242 = vmul.f32 %v240, %v240
        %v243 = vmul.f32 %v241, %v241
        %v244 = vld [vmem:[%s1] sm:$0xf]
        %v245 = vld [vmem:[%s2] sm:$0xf]
        %v246 = vmax.f32 %v245, 0.0
        %v247 = vand.u32 2147483647, %v245
        %v248 = vsub.f32 0.0, %v247
        %v249 = vmul.f32 %v248, 1.442695
        %v250 = vpow.pop %v249
        %v251 = vadd.f32 %v250, 1.0
        %v252 = vlog2.pop %v251
        %v253 = vmul.f32 %v252, 0.6931472
        %v254 = vmul.f32 -0.5, %v250
        %v255 = vadd.f32 %v254, 1.0
        %v256 = vmul.f32 %v255, %v250
        %v257 = vand.u32 2147483647, %v250
        %vm258 = vcmp.lt.f32.partialorder %v257, 0.0004427343
        %v259 = vsel %vm258, %v256, %v253
        %v260 = vadd.f32 %v246, %v259
        %v261 = vmul.f32 %v244, %v244
        %v262 = vadd.f32 %v260, %v261
        %v263 = vrcp.pop %v260
        %v264 = vmul.f32 %v260, %v263
        %v265 = vsub.f32 2.0, %v264
        %v266 = vmul.f32 %v263, %v265
        %v267 = vlog2.pop %v260
        %v268 = vmul.f32 %v267, 0.6931472
        %v269 = vmul.f32 %v261, %v266
        %v270 = vadd.f32 %v268, %v269
        %vm271 = vcmask 64512
        %v273 = vsel %vm271, %v242, 0
        %v276 = vsel %vm271, %v243, 0
        %v279 = vsel %vm271, %v266, 0
        %281 = vmatpush.xpose.msra.mxu0 0.0
        %282 = vmatpush.xpose.msra.mxu0 0.0
        %283 = vmatpush.xpose.msra.mxu0 0.0
        %284 = vmatpush.xpose.msra.mxu0 0.0
        %285 = vmatpush.xpose.msra.mxu0 0.0
        %286 = vmatpush.xpose.msra.mxu0 0.0
        %287 = vmatpush.xpose.msra.mxu0 0.0
        %288 = vmatpush.xpose.msra.mxu0 0.0
        %289 = vmatpush.xpose.msra.mxu0 0.0
        %290 = vmatpush.xpose.msra.mxu0 0.0
        %291 = vmatpush.xpose.msra.mxu0 0.0
        %292 = vmatpush.xpose.msra.mxu0 0.0
        %293 = vmatpush.xpose.msra.mxu0 0.0
        %294 = vmatpush.xpose.msra.mxu0 0.0
        %295 = vmatpush.xpose.msra.mxu0 0.0
        %296 = vmatpush.xpose.msra.mxu0 %v279
        %297 = vmatmul.f32.gmra.mxu0 %v273
        %v298 = vpop.f32.mrf.mxu0
        %v299 = vadd.f32 0.0, %v298
        %300 = vmatmul.f32.gmra.mxu0 %v276
        %v301 = vpop.f32.mrf.mxu0
        %v302 = vadd.f32 0.0, %v301
        %303 = vdwg.mxu0
        %v304 = vmul.f32 %v244, %v266
        %v306 = vsel %vm271, %v240, 0
        %v309 = vsel %vm271, %v241, 0
        %v312 = vsel %vm271, %v304, 0
        %314 = vmatpush.xpose.msra.mxu0 0.0
        %315 = vmatpush.xpose.msra.mxu0 0.0
        %316 = vmatpush.xpose.msra.mxu0 0.0
        %317 = vmatpush.xpose.msra.mxu0 0.0
        %318 = vmatpush.xpose.msra.mxu0 0.0
        %319 = vmatpush.xpose.msra.mxu0 0.0
        %320 = vmatpush.xpose.msra.mxu0 0.0
        %321 = vmatpush.xpose.msra.mxu0 0.0
        %322 = vmatpush.xpose.msra.mxu0 0.0
        %323 = vmatpush.xpose.msra.mxu0 0.0
        %324 = vmatpush.xpose.msra.mxu0 0.0
        %325 = vmatpush.xpose.msra.mxu0 0.0
        %326 = vmatpush.xpose.msra.mxu0 0.0
        %327 = vmatpush.xpose.msra.mxu0 0.0
        %328 = vmatpush.xpose.msra.mxu0 0.0
        %329 = vmatpush.xpose.msra.mxu0 %v312
        %330 = vmatmul.f32.gmra.mxu0 %v306
        %v331 = vpop.f32.mrf.mxu0
        %v332 = vadd.f32 0.0, %v331
        %333 = vmatmul.f32.gmra.mxu0 %v309
        %v334 = vpop.f32.mrf.mxu0
        %v335 = vadd.f32 0.0, %v334
        %336 = vdwg.mxu0
        %v338 = vsel %vm271, 1.0, 0
        %v341 = vsel %vm271, %v270, 0
        %343 = vmatpush.xpose.msra.mxu0 0.0
        %344 = vmatpush.xpose.msra.mxu0 0.0
        %345 = vmatpush.xpose.msra.mxu0 0.0
        %346 = vmatpush.xpose.msra.mxu0 0.0
        %347 = vmatpush.xpose.msra.mxu0 0.0
        %348 = vmatpush.xpose.msra.mxu0 0.0
        %349 = vmatpush.xpose.msra.mxu0 0.0
        %350 = vmatpush.xpose.msra.mxu0 0.0
        %351 = vmatpush.xpose.msra.mxu0 0.0
        %352 = vmatpush.xpose.msra.mxu0 0.0
        %353 = vmatpush.xpose.msra.mxu0 0.0
        %354 = vmatpush.xpose.msra.mxu0 0.0
        %355 = vmatpush.xpose.msra.mxu0 0.0
        %356 = vmatpush.xpose.msra.mxu0 0.0
        %357 = vmatpush.xpose.msra.mxu0 0.0
        %358 = vmatpush.xpose.msra.mxu0 %v341
        %359 = vmatmul.f32.gmra.mxu0 %v338
        %v360 = vpop.f32.mrf.mxu0
        %v361 = vadd.f32 14.703016, %v360
        %362 = vdwg.mxu0
        %v363 = vperm.slane %v361, 0
        %v364 = vadd.f32 %v363, %v299
        %v365 = vadd.f32 %v363, %v302
        %v366 = vmul.f32 %v332, 2.0
        %v367 = vmul.f32 %v335, 2.0
        %v368 = vsub.f32 %v364, %v366
        %v369 = vsub.f32 %v365, %v367
        %v370 = vmul.f32 %v368, -0.5
        %v371 = vmul.f32 %v369, -0.5
        %v372 = vadd.f32 %v370, -1.3862944
        %v373 = vadd.f32 %v371, -1.3862944
        %vm374 = vcmask 31744
        %v375 = vsel %vm374, %v372, -inf
        %376 = vmax.xlane.f32.xlu0 %v375
        %v377 = vpop.xlane.xlu0 %376
        %v378 = vsel %vm374, %v373, -inf
        %379 = vmax.xlane.f32.xlu0 %v378
        %v380 = vpop.xlane.xlu0 %379
        %v381 = vsub.f32 %v372, %v377
        %v382 = vsub.f32 %v373, %v380
        %v383 = vmul.f32 %v381, 1.442695
        %v384 = vpow.pop %v383
        %v385 = vmul.f32 %v382, 1.442695
        %v386 = vpow.pop %v385
        %v387 = vsel %vm374, %v384, 0.0
        %388 = vadd.xlane.f32.xlu0 %v387
        %v389 = vpop.xlane.xlu0 %388
        %v390 = vsel %vm374, %v386, 0.0
        %391 = vadd.xlane.f32.xlu0 %v390
        %v392 = vpop.xlane.xlu0 %391
        %v393 = vrcp.pop %v389
        %v394 = vrcp.pop %v392
        %v395 = vmul.f32 %v389, %v393
        %v396 = vmul.f32 %v392, %v394
        %v397 = vsub.f32 2.0, %v395
        %v398 = vsub.f32 2.0, %v396
        %v399 = vmul.f32 %v393, %v397
        %v400 = vmul.f32 %v394, %v398
        %v401 = vmul.f32 %v384, %v399
        %v402 = vmul.f32 %v386, %v400
        %403 = vxpose.xlu0.b32.start [1/16] %v401, 128
        %404 = vxpose.xlu0.b32.cont [2/16] %v402, 128
        %405 = vxpose.xlu0.b32.cont [3/16] 0.0, 128
        %406 = vxpose.xlu0.b32.cont [4/16] 0.0, 128
        %407 = vxpose.xlu0.b32.cont [5/16] 0.0, 128
        %408 = vxpose.xlu0.b32.cont [6/16] 0.0, 128
        %409 = vxpose.xlu0.b32.cont [7/16] 0.0, 128
        %410 = vxpose.xlu0.b32.cont [8/16] 0.0, 128
        %411 = vxpose.xlu0.b32.cont [9/16] 0.0, 128
        %412 = vxpose.xlu0.b32.cont [10/16] 0.0, 128
        %413 = vxpose.xlu0.b32.cont [11/16] 0.0, 128
        %414 = vxpose.xlu0.b32.cont [12/16] 0.0, 128
        %415 = vxpose.xlu0.b32.cont [13/16] 0.0, 128
        %416 = vxpose.xlu0.b32.cont [14/16] 0.0, 128
        %417 = vxpose.xlu0.b32.cont [15/16] 0.0, 128
        %418 = vxpose.xlu0.b32.end [16/16] 0.0, 128
        %v419 = vpop.trf.xlu0
        %v420 = vpop.trf.xlu0
        %v421 = vpop.trf.xlu0
        %v422 = vpop.trf.xlu0
        %v423 = vpop.trf.xlu0
        %v424 = vpop.trf.xlu0
        %v425 = vpop.trf.xlu0
        %v426 = vpop.trf.xlu0
        %v427 = vpop.trf.xlu0
        %v428 = vpop.trf.xlu0
        %v429 = vpop.trf.xlu0
        %v430 = vpop.trf.xlu0
        %v431 = vpop.trf.xlu0
        %v432 = vpop.trf.xlu0
        %v433 = vpop.trf.xlu0
        %v434 = vpop.trf.xlu0
        %vm435 = vcmask 130048
        %v437 = vsel %vm435, %v419, 0
        %439 = vmatpush.msra.mxu0 0.0
        %440 = vmatpush.msra.mxu0 0.0
        %441 = vmatpush.msra.mxu0 0.0
        %442 = vmatpush.msra.mxu0 0.0
        %443 = vmatpush.msra.mxu0 0.0
        %444 = vmatpush.msra.mxu0 0.0
        %445 = vmatpush.msra.mxu0 0.0
        %446 = vmatpush.msra.mxu0 0.0
        %447 = vmatpush.msra.mxu0 0.0
        %448 = vmatpush.msra.mxu0 0.0
        %449 = vmatpush.msra.mxu0 0.0
        %450 = vmatpush.msra.mxu0 0.0
        %451 = vmatpush.msra.mxu0 0.0
        %452 = vmatpush.msra.mxu0 0.0
        %453 = vmatpush.msra.mxu0 1.0
        %454 = vmatpush.msra.mxu0 1.0
        %455 = vmatmul.f32.gmra.mxu0 %v437
        %v456 = vpop.f32.mrf.mxu0
        %v457 = vadd.f32 1.0, %v456
        %458 = vdwg.mxu0
        %v459 = vrcp.pop %v457
        %v460 = vmul.f32 %v457, %v459
        %v461 = vsub.f32 2.0, %v460
        %v462 = vmul.f32 %v459, %v461
        %463 = vmatpush.msra.mxu0 0.0
        %464 = vmatpush.msra.mxu0 0.0
        %465 = vmatpush.msra.mxu0 0.0
        %466 = vmatpush.msra.mxu0 0.0
        %467 = vmatpush.msra.mxu0 0.0
        %468 = vmatpush.msra.mxu0 0.0
        %469 = vmatpush.msra.mxu0 0.0
        %470 = vmatpush.msra.mxu0 0.0
        %471 = vmatpush.msra.mxu0 0.0
        %472 = vmatpush.msra.mxu0 0.0
        %473 = vmatpush.msra.mxu0 0.0
        %474 = vmatpush.msra.mxu0 0.0
        %475 = vmatpush.msra.mxu0 0.0
        %476 = vmatpush.msra.mxu0 0.0
        %477 = vmatpush.msra.mxu0 %v241
        %478 = vmatpush.msra.mxu0 %v240
        %479 = vmatmul.f32.gmra.mxu0 %v437
        %v480 = vpop.f32.mrf.mxu0
        %v481 = vadd.f32 %v244, %v480
        %482 = vdwg.mxu0
        %484 = vset.pattern.permute.xlu0 0
        %485 = vperm.xlu0 %484, %v462
        %v486 = vpop.permute.xlu0 %485
        %v488 = vmul.f32 %v481, %v486
        %489 = vmatpush.msra.mxu0 0.0
        %490 = vmatpush.msra.mxu0 0.0
        %491 = vmatpush.msra.mxu0 0.0
        %492 = vmatpush.msra.mxu0 0.0
        %493 = vmatpush.msra.mxu0 0.0
        %494 = vmatpush.msra.mxu0 0.0
        %495 = vmatpush.msra.mxu0 0.0
        %496 = vmatpush.msra.mxu0 0.0
        %497 = vmatpush.msra.mxu0 0.0
        %498 = vmatpush.msra.mxu0 0.0
        %499 = vmatpush.msra.mxu0 0.0
        %500 = vmatpush.msra.mxu0 0.0
        %501 = vmatpush.msra.mxu0 0.0
        %502 = vmatpush.msra.mxu0 0.0
        %503 = vmatpush.msra.mxu0 %v243
        %504 = vmatpush.msra.mxu0 %v242
        %505 = vmatmul.f32.gmra.mxu0 %v437
        %v506 = vpop.f32.mrf.mxu0
        %v507 = vadd.f32 %v262, %v506
        %508 = vdwg.mxu0
        %v509 = vmul.f32 %v507, %v486
        %v510 = vmul.f32 %v488, %v488
        %v511 = vsub.f32 %v509, %v510
        %v512 = vmax.f32 %v511, 1e-20
        %v513 = vsel %vm374, %v401, 0.0
        %v514 = vsel %vm374, %v402, 0.0
        %v515 = vadd.f32 %v513, %v514
        %v516 = vrot.slane %v515, 4
        %v517 = vadd.f32 %v515, %v516
        %v518 = vrot.slane %v517, 2
        %v519 = vadd.f32 %v517, %v518
        %v520 = vrot.slane %v519, 1
        %v521 = vadd.f32 %v519, %v520
        %v522 = vadd.f32 %v521, 1.0
        %v523 = vsel %vm374, %v522, 0.0
        %524 = vadd.xlane.f32.xlu0 %v523
        %v525 = vpop.xlane.xlu0 %524
        %v526 = vrcp.pop %v525
        %v527 = vmul.f32 %v525, %v526
        %v528 = vsub.f32 2.0, %v527
        %v529 = vmul.f32 %v526, %v528
        %v530 = vmul.f32 %v522, %v529
        %v531 = vlog2.pop %v530
        %v532 = vmul.f32 %v531, 0.6931472
        %v533 = vrcp.pop %v512
        %v534 = vmul.f32 %v512, %v533
        %v535 = vsub.f32 2.0, %v534
        %v536 = vmul.f32 %v533, %v535
        %v537 = vlog2.pop %v512
        %v538 = vmul.f32 %v537, 0.6931472
        %v539 = vmul.f32 %v510, %v536
        %v540 = vadd.f32 %v538, %v539
        %v542 = vsel %vm271, %v536, 0
        %544 = vmatpush.xpose.msra.mxu0 0.0
        %545 = vmatpush.xpose.msra.mxu0 0.0
        %546 = vmatpush.xpose.msra.mxu0 0.0
        %547 = vmatpush.xpose.msra.mxu0 0.0
        %548 = vmatpush.xpose.msra.mxu0 0.0
        %549 = vmatpush.xpose.msra.mxu0 0.0
        %550 = vmatpush.xpose.msra.mxu0 0.0
        %551 = vmatpush.xpose.msra.mxu0 0.0
        %552 = vmatpush.xpose.msra.mxu0 0.0
        %553 = vmatpush.xpose.msra.mxu0 0.0
        %554 = vmatpush.xpose.msra.mxu0 0.0
        %555 = vmatpush.xpose.msra.mxu0 0.0
        %556 = vmatpush.xpose.msra.mxu0 0.0
        %557 = vmatpush.xpose.msra.mxu0 0.0
        %558 = vmatpush.xpose.msra.mxu0 0.0
        %559 = vmatpush.xpose.msra.mxu0 %v542
        %560 = vmatmul.f32.gmra.mxu0 %v273
        %v561 = vpop.f32.mrf.mxu0
        %v562 = vadd.f32 0.0, %v561
        %563 = vmatmul.f32.gmra.mxu0 %v276
        %v564 = vpop.f32.mrf.mxu0
        %v565 = vadd.f32 0.0, %v564
        %566 = vdwg.mxu0
        %v567 = vmul.f32 %v488, %v536
        %v569 = vsel %vm271, %v567, 0
        %571 = vmatpush.xpose.msra.mxu0 0.0
        %572 = vmatpush.xpose.msra.mxu0 0.0
        %573 = vmatpush.xpose.msra.mxu0 0.0
        %574 = vmatpush.xpose.msra.mxu0 0.0
        %575 = vmatpush.xpose.msra.mxu0 0.0
        %576 = vmatpush.xpose.msra.mxu0 0.0
        %577 = vmatpush.xpose.msra.mxu0 0.0
        %578 = vmatpush.xpose.msra.mxu0 0.0
        %579 = vmatpush.xpose.msra.mxu0 0.0
        %580 = vmatpush.xpose.msra.mxu0 0.0
        %581 = vmatpush.xpose.msra.mxu0 0.0
        %582 = vmatpush.xpose.msra.mxu0 0.0
        %583 = vmatpush.xpose.msra.mxu0 0.0
        %584 = vmatpush.xpose.msra.mxu0 0.0
        %585 = vmatpush.xpose.msra.mxu0 0.0
        %586 = vmatpush.xpose.msra.mxu0 %v569
        %587 = vmatmul.f32.gmra.mxu0 %v306
        %v588 = vpop.f32.mrf.mxu0
        %v589 = vadd.f32 0.0, %v588
        %590 = vmatmul.f32.gmra.mxu0 %v309
        %v591 = vpop.f32.mrf.mxu0
        %v592 = vadd.f32 0.0, %v591
        %593 = vdwg.mxu0
        %v595 = vsel %vm271, %v540, 0
        %597 = vmatpush.xpose.msra.mxu0 0.0
        %598 = vmatpush.xpose.msra.mxu0 0.0
        %599 = vmatpush.xpose.msra.mxu0 0.0
        %600 = vmatpush.xpose.msra.mxu0 0.0
        %601 = vmatpush.xpose.msra.mxu0 0.0
        %602 = vmatpush.xpose.msra.mxu0 0.0
        %603 = vmatpush.xpose.msra.mxu0 0.0
        %604 = vmatpush.xpose.msra.mxu0 0.0
        %605 = vmatpush.xpose.msra.mxu0 0.0
        %606 = vmatpush.xpose.msra.mxu0 0.0
        %607 = vmatpush.xpose.msra.mxu0 0.0
        %608 = vmatpush.xpose.msra.mxu0 0.0
        %609 = vmatpush.xpose.msra.mxu0 0.0
        %610 = vmatpush.xpose.msra.mxu0 0.0
        %611 = vmatpush.xpose.msra.mxu0 0.0
        %612 = vmatpush.xpose.msra.mxu0 %v595
        %613 = vmatmul.f32.gmra.mxu0 %v338
        %v614 = vpop.f32.mrf.mxu0
        %v615 = vadd.f32 14.703016, %v614
        %616 = vdwg.mxu0
        %v617 = vperm.slane %v615, 0
        %v618 = vadd.f32 %v617, %v562
        %v619 = vadd.f32 %v617, %v565
        %v620 = vmul.f32 %v589, 2.0
        %v621 = vmul.f32 %v592, 2.0
        %v622 = vsub.f32 %v618, %v620
        %v623 = vsub.f32 %v619, %v621
        %v624 = vmul.f32 %v622, -0.5
        %v625 = vmul.f32 %v623, -0.5
        %v626 = vadd.f32 %v624, %v532
        %v627 = vadd.f32 %v625, %v532
        %v628 = vsel %vm374, %v626, -inf
        %629 = vmax.xlane.f32.xlu0 %v628
        %v630 = vpop.xlane.xlu0 %629
        %v631 = vsel %vm374, %v627, -inf
        %632 = vmax.xlane.f32.xlu0 %v631
        %v633 = vpop.xlane.xlu0 %632
        %v634 = vsub.f32 %v626, %v630
        %v635 = vsub.f32 %v627, %v633
        %v636 = vmul.f32 %v634, 1.442695
        %v637 = vpow.pop %v636
        %v638 = vmul.f32 %v635, 1.442695
        %v639 = vpow.pop %v638
        %v640 = vsel %vm374, %v637, 0.0
        %641 = vadd.xlane.f32.xlu0 %v640
        %v642 = vpop.xlane.xlu0 %641
        %v643 = vsel %vm374, %v639, 0.0
        %644 = vadd.xlane.f32.xlu0 %v643
        %v645 = vpop.xlane.xlu0 %644
        %v646 = vrcp.pop %v642
        %v647 = vrcp.pop %v645
        %v648 = vmul.f32 %v642, %v646
        %v649 = vmul.f32 %v645, %v647
        %v650 = vsub.f32 2.0, %v648
        %v651 = vsub.f32 2.0, %v649
        %v652 = vmul.f32 %v646, %v650
        %v653 = vmul.f32 %v647, %v651
        %v654 = vmul.f32 %v637, %v652
        %v655 = vmul.f32 %v639, %v653
        %656 = vxpose.xlu0.b32.start [1/16] %v654, 128
        %657 = vxpose.xlu0.b32.cont [2/16] %v655, 128
        %658 = vxpose.xlu0.b32.cont [3/16] 0.0, 128
        %659 = vxpose.xlu0.b32.cont [4/16] 0.0, 128
        %660 = vxpose.xlu0.b32.cont [5/16] 0.0, 128
        %661 = vxpose.xlu0.b32.cont [6/16] 0.0, 128
        %662 = vxpose.xlu0.b32.cont [7/16] 0.0, 128
        %663 = vxpose.xlu0.b32.cont [8/16] 0.0, 128
        %664 = vxpose.xlu0.b32.cont [9/16] 0.0, 128
        %665 = vxpose.xlu0.b32.cont [10/16] 0.0, 128
        %666 = vxpose.xlu0.b32.cont [11/16] 0.0, 128
        %667 = vxpose.xlu0.b32.cont [12/16] 0.0, 128
        %668 = vxpose.xlu0.b32.cont [13/16] 0.0, 128
        %669 = vxpose.xlu0.b32.cont [14/16] 0.0, 128
        %670 = vxpose.xlu0.b32.cont [15/16] 0.0, 128
        %671 = vxpose.xlu0.b32.end [16/16] 0.0, 128
        %v672 = vpop.trf.xlu0
        %v673 = vpop.trf.xlu0
        %v674 = vpop.trf.xlu0
        %v675 = vpop.trf.xlu0
        %v676 = vpop.trf.xlu0
        %v677 = vpop.trf.xlu0
        %v678 = vpop.trf.xlu0
        %v679 = vpop.trf.xlu0
        %v680 = vpop.trf.xlu0
        %v681 = vpop.trf.xlu0
        %v682 = vpop.trf.xlu0
        %v683 = vpop.trf.xlu0
        %v684 = vpop.trf.xlu0
        %v685 = vpop.trf.xlu0
        %v686 = vpop.trf.xlu0
        %v687 = vpop.trf.xlu0
        %v689 = vsel %vm435, %v672, 0
        %691 = vmatpush.msra.mxu0 0.0
        %692 = vmatpush.msra.mxu0 0.0
        %693 = vmatpush.msra.mxu0 0.0
        %694 = vmatpush.msra.mxu0 0.0
        %695 = vmatpush.msra.mxu0 0.0
        %696 = vmatpush.msra.mxu0 0.0
        %697 = vmatpush.msra.mxu0 0.0
        %698 = vmatpush.msra.mxu0 0.0
        %699 = vmatpush.msra.mxu0 0.0
        %700 = vmatpush.msra.mxu0 0.0
        %701 = vmatpush.msra.mxu0 0.0
        %702 = vmatpush.msra.mxu0 0.0
        %703 = vmatpush.msra.mxu0 0.0
        %704 = vmatpush.msra.mxu0 0.0
        %705 = vmatpush.msra.mxu0 1.0
        %706 = vmatpush.msra.mxu0 1.0
        %707 = vmatmul.f32.gmra.mxu0 %v689
        %v708 = vpop.f32.mrf.mxu0
        %v709 = vadd.f32 1.0, %v708
        %710 = vdwg.mxu0
        %v711 = vrcp.pop %v709
        %v712 = vmul.f32 %v709, %v711
        %v713 = vsub.f32 2.0, %v712
        %v714 = vmul.f32 %v711, %v713
        %715 = vmatpush.msra.mxu0 0.0
        %716 = vmatpush.msra.mxu0 0.0
        %717 = vmatpush.msra.mxu0 0.0
        %718 = vmatpush.msra.mxu0 0.0
        %719 = vmatpush.msra.mxu0 0.0
        %720 = vmatpush.msra.mxu0 0.0
        %721 = vmatpush.msra.mxu0 0.0
        %722 = vmatpush.msra.mxu0 0.0
        %723 = vmatpush.msra.mxu0 0.0
        %724 = vmatpush.msra.mxu0 0.0
        %725 = vmatpush.msra.mxu0 0.0
        %726 = vmatpush.msra.mxu0 0.0
        %727 = vmatpush.msra.mxu0 0.0
        %728 = vmatpush.msra.mxu0 0.0
        %729 = vmatpush.msra.mxu0 %v241
        %730 = vmatpush.msra.mxu0 %v240
        %731 = vmatmul.f32.gmra.mxu0 %v689
        %v732 = vpop.f32.mrf.mxu0
        %v733 = vadd.f32 %v244, %v732
        %734 = vdwg.mxu0
        %736 = vset.pattern.permute.xlu0 0
        %737 = vperm.xlu0 %736, %v714
        %v738 = vpop.permute.xlu0 %737
        %v740 = vmul.f32 %v733, %v738
        %741 = vmatpush.msra.mxu0 0.0
        %742 = vmatpush.msra.mxu0 0.0
        %743 = vmatpush.msra.mxu0 0.0
        %744 = vmatpush.msra.mxu0 0.0
        %745 = vmatpush.msra.mxu0 0.0
        %746 = vmatpush.msra.mxu0 0.0
        %747 = vmatpush.msra.mxu0 0.0
        %748 = vmatpush.msra.mxu0 0.0
        %749 = vmatpush.msra.mxu0 0.0
        %750 = vmatpush.msra.mxu0 0.0
        %751 = vmatpush.msra.mxu0 0.0
        %752 = vmatpush.msra.mxu0 0.0
        %753 = vmatpush.msra.mxu0 0.0
        %754 = vmatpush.msra.mxu0 0.0
        %755 = vmatpush.msra.mxu0 %v243
        %756 = vmatpush.msra.mxu0 %v242
        %757 = vmatmul.f32.gmra.mxu0 %v689
        %v758 = vpop.f32.mrf.mxu0
        %v759 = vadd.f32 %v262, %v758
        %760 = vdwg.mxu0
        %v761 = vmul.f32 %v759, %v738
        %v762 = vmul.f32 %v740, %v740
        %v763 = vsub.f32 %v761, %v762
        %v764 = vmax.f32 %v763, 1e-20
        %v765 = vsel %vm374, %v654, 0.0
        %v766 = vsel %vm374, %v655, 0.0
        %v767 = vadd.f32 %v765, %v766
        %v768 = vrot.slane %v767, 4
        %v769 = vadd.f32 %v767, %v768
        %v770 = vrot.slane %v769, 2
        %v771 = vadd.f32 %v769, %v770
        %v772 = vrot.slane %v771, 1
        %v773 = vadd.f32 %v771, %v772
        %v774 = vadd.f32 %v773, 1.0
        %v775 = vsel %vm374, %v774, 0.0
        %776 = vadd.xlane.f32.xlu0 %v775
        %v777 = vpop.xlane.xlu0 %776
        %v778 = vrcp.pop %v777
        %v779 = vmul.f32 %v777, %v778
        %v780 = vsub.f32 2.0, %v779
        %v781 = vmul.f32 %v778, %v780
        %v782 = vmul.f32 %v774, %v781
        %v783 = vlog2.pop %v782
        %v784 = vmul.f32 %v783, 0.6931472
        %v785 = vrcp.pop %v764
        %v786 = vmul.f32 %v764, %v785
        %v787 = vsub.f32 2.0, %v786
        %v788 = vmul.f32 %v785, %v787
        %v789 = vlog2.pop %v764
        %v790 = vmul.f32 %v789, 0.6931472
        %v791 = vmul.f32 %v762, %v788
        %v792 = vadd.f32 %v790, %v791
        %v794 = vsel %vm271, %v788, 0
        %796 = vmatpush.xpose.msra.mxu0 0.0
        %797 = vmatpush.xpose.msra.mxu0 0.0
        %798 = vmatpush.xpose.msra.mxu0 0.0
        %799 = vmatpush.xpose.msra.mxu0 0.0
        %800 = vmatpush.xpose.msra.mxu0 0.0
        %801 = vmatpush.xpose.msra.mxu0 0.0
        %802 = vmatpush.xpose.msra.mxu0 0.0
        %803 = vmatpush.xpose.msra.mxu0 0.0
        %804 = vmatpush.xpose.msra.mxu0 0.0
        %805 = vmatpush.xpose.msra.mxu0 0.0
        %806 = vmatpush.xpose.msra.mxu0 0.0
        %807 = vmatpush.xpose.msra.mxu0 0.0
        %808 = vmatpush.xpose.msra.mxu0 0.0
        %809 = vmatpush.xpose.msra.mxu0 0.0
        %810 = vmatpush.xpose.msra.mxu0 0.0
        %811 = vmatpush.xpose.msra.mxu0 %v794
        %812 = vmatmul.f32.gmra.mxu0 %v273
        %v813 = vpop.f32.mrf.mxu0
        %v814 = vadd.f32 0.0, %v813
        %815 = vmatmul.f32.gmra.mxu0 %v276
        %v816 = vpop.f32.mrf.mxu0
        %v817 = vadd.f32 0.0, %v816
        %818 = vdwg.mxu0
        %v819 = vmul.f32 %v740, %v788
        %v821 = vsel %vm271, %v819, 0
        %823 = vmatpush.xpose.msra.mxu0 0.0
        %824 = vmatpush.xpose.msra.mxu0 0.0
        %825 = vmatpush.xpose.msra.mxu0 0.0
        %826 = vmatpush.xpose.msra.mxu0 0.0
        %827 = vmatpush.xpose.msra.mxu0 0.0
        %828 = vmatpush.xpose.msra.mxu0 0.0
        %829 = vmatpush.xpose.msra.mxu0 0.0
        %830 = vmatpush.xpose.msra.mxu0 0.0
        %831 = vmatpush.xpose.msra.mxu0 0.0
        %832 = vmatpush.xpose.msra.mxu0 0.0
        %833 = vmatpush.xpose.msra.mxu0 0.0
        %834 = vmatpush.xpose.msra.mxu0 0.0
        %835 = vmatpush.xpose.msra.mxu0 0.0
        %836 = vmatpush.xpose.msra.mxu0 0.0
        %837 = vmatpush.xpose.msra.mxu0 0.0
        %838 = vmatpush.xpose.msra.mxu0 %v821
        %839 = vmatmul.f32.gmra.mxu0 %v306
        %v840 = vpop.f32.mrf.mxu0
        %v841 = vadd.f32 0.0, %v840
        %842 = vmatmul.f32.gmra.mxu0 %v309
        %v843 = vpop.f32.mrf.mxu0
        %v844 = vadd.f32 0.0, %v843
        %845 = vdwg.mxu0
        %v847 = vsel %vm271, %v792, 0
        %849 = vmatpush.xpose.msra.mxu0 0.0
        %850 = vmatpush.xpose.msra.mxu0 0.0
        %851 = vmatpush.xpose.msra.mxu0 0.0
        %852 = vmatpush.xpose.msra.mxu0 0.0
        %853 = vmatpush.xpose.msra.mxu0 0.0
        %854 = vmatpush.xpose.msra.mxu0 0.0
        %855 = vmatpush.xpose.msra.mxu0 0.0
        %856 = vmatpush.xpose.msra.mxu0 0.0
        %857 = vmatpush.xpose.msra.mxu0 0.0
        %858 = vmatpush.xpose.msra.mxu0 0.0
        %859 = vmatpush.xpose.msra.mxu0 0.0
        %860 = vmatpush.xpose.msra.mxu0 0.0
        %861 = vmatpush.xpose.msra.mxu0 0.0
        %862 = vmatpush.xpose.msra.mxu0 0.0
        %863 = vmatpush.xpose.msra.mxu0 0.0
        %864 = vmatpush.xpose.msra.mxu0 %v847
        %865 = vmatmul.f32.gmra.mxu0 %v338
        %v866 = vpop.f32.mrf.mxu0
        %v867 = vadd.f32 14.703016, %v866
        %868 = vdwg.mxu0
        %v869 = vperm.slane %v867, 0
        %v870 = vadd.f32 %v869, %v814
        %v871 = vadd.f32 %v869, %v817
        %v872 = vmul.f32 %v841, 2.0
        %v873 = vmul.f32 %v844, 2.0
        %v874 = vsub.f32 %v870, %v872
        %v875 = vsub.f32 %v871, %v873
        %v876 = vmul.f32 %v874, -0.5
        %v877 = vmul.f32 %v875, -0.5
        %v878 = vadd.f32 %v876, %v784
        %v879 = vadd.f32 %v877, %v784
        %v880 = vsel %vm374, %v878, -inf
        %881 = vmax.xlane.f32.xlu0 %v880
        %v882 = vpop.xlane.xlu0 %881
        %v883 = vsel %vm374, %v879, -inf
        %884 = vmax.xlane.f32.xlu0 %v883
        %v885 = vpop.xlane.xlu0 %884
        %v886 = vsub.f32 %v878, %v882
        %v887 = vsub.f32 %v879, %v885
        %v888 = vmul.f32 %v886, 1.442695
        %v889 = vpow.pop %v888
        %v890 = vmul.f32 %v887, 1.442695
        %v891 = vpow.pop %v890
        %v892 = vsel %vm374, %v889, 0.0
        %893 = vadd.xlane.f32.xlu0 %v892
        %v894 = vpop.xlane.xlu0 %893
        %v895 = vsel %vm374, %v891, 0.0
        %896 = vadd.xlane.f32.xlu0 %v895
        %v897 = vpop.xlane.xlu0 %896
        %v898 = vrcp.pop %v894
        %v899 = vrcp.pop %v897
        %v900 = vmul.f32 %v894, %v898
        %v901 = vmul.f32 %v897, %v899
        %v902 = vsub.f32 2.0, %v900
        %v903 = vsub.f32 2.0, %v901
        %v904 = vmul.f32 %v898, %v902
        %v905 = vmul.f32 %v899, %v903
        %v906 = vmul.f32 %v889, %v904
        %v907 = vmul.f32 %v891, %v905
        %908 = vxpose.xlu0.b32.start [1/16] %v906, 128
        %909 = vxpose.xlu0.b32.cont [2/16] %v907, 128
        %910 = vxpose.xlu0.b32.cont [3/16] 0.0, 128
        %911 = vxpose.xlu0.b32.cont [4/16] 0.0, 128
        %912 = vxpose.xlu0.b32.cont [5/16] 0.0, 128
        %913 = vxpose.xlu0.b32.cont [6/16] 0.0, 128
        %914 = vxpose.xlu0.b32.cont [7/16] 0.0, 128
        %915 = vxpose.xlu0.b32.cont [8/16] 0.0, 128
        %916 = vxpose.xlu0.b32.cont [9/16] 0.0, 128
        %917 = vxpose.xlu0.b32.cont [10/16] 0.0, 128
        %918 = vxpose.xlu0.b32.cont [11/16] 0.0, 128
        %919 = vxpose.xlu0.b32.cont [12/16] 0.0, 128
        %920 = vxpose.xlu0.b32.cont [13/16] 0.0, 128
        %921 = vxpose.xlu0.b32.cont [14/16] 0.0, 128
        %922 = vxpose.xlu0.b32.cont [15/16] 0.0, 128
        %923 = vxpose.xlu0.b32.end [16/16] 0.0, 128
        %v924 = vpop.trf.xlu0
        %v925 = vpop.trf.xlu0
        %v926 = vpop.trf.xlu0
        %v927 = vpop.trf.xlu0
        %v928 = vpop.trf.xlu0
        %v929 = vpop.trf.xlu0
        %v930 = vpop.trf.xlu0
        %v931 = vpop.trf.xlu0
        %v932 = vpop.trf.xlu0
        %v933 = vpop.trf.xlu0
        %v934 = vpop.trf.xlu0
        %v935 = vpop.trf.xlu0
        %v936 = vpop.trf.xlu0
        %v937 = vpop.trf.xlu0
        %v938 = vpop.trf.xlu0
        %v939 = vpop.trf.xlu0
        %v941 = vsel %vm435, %v924, 0
        %943 = vmatpush.msra.mxu0 0.0
        %944 = vmatpush.msra.mxu0 0.0
        %945 = vmatpush.msra.mxu0 0.0
        %946 = vmatpush.msra.mxu0 0.0
        %947 = vmatpush.msra.mxu0 0.0
        %948 = vmatpush.msra.mxu0 0.0
        %949 = vmatpush.msra.mxu0 0.0
        %950 = vmatpush.msra.mxu0 0.0
        %951 = vmatpush.msra.mxu0 0.0
        %952 = vmatpush.msra.mxu0 0.0
        %953 = vmatpush.msra.mxu0 0.0
        %954 = vmatpush.msra.mxu0 0.0
        %955 = vmatpush.msra.mxu0 0.0
        %956 = vmatpush.msra.mxu0 0.0
        %957 = vmatpush.msra.mxu0 1.0
        %958 = vmatpush.msra.mxu0 1.0
        %959 = vmatmul.f32.gmra.mxu0 %v941
        %v960 = vpop.f32.mrf.mxu0
        %v961 = vadd.f32 1.0, %v960
        %962 = vdwg.mxu0
        %v963 = vrcp.pop %v961
        %v964 = vmul.f32 %v961, %v963
        %v965 = vsub.f32 2.0, %v964
        %v966 = vmul.f32 %v963, %v965
        %967 = vmatpush.msra.mxu0 0.0
        %968 = vmatpush.msra.mxu0 0.0
        %969 = vmatpush.msra.mxu0 0.0
        %970 = vmatpush.msra.mxu0 0.0
        %971 = vmatpush.msra.mxu0 0.0
        %972 = vmatpush.msra.mxu0 0.0
        %973 = vmatpush.msra.mxu0 0.0
        %974 = vmatpush.msra.mxu0 0.0
        %975 = vmatpush.msra.mxu0 0.0
        %976 = vmatpush.msra.mxu0 0.0
        %977 = vmatpush.msra.mxu0 0.0
        %978 = vmatpush.msra.mxu0 0.0
        %979 = vmatpush.msra.mxu0 0.0
        %980 = vmatpush.msra.mxu0 0.0
        %981 = vmatpush.msra.mxu0 %v241
        %982 = vmatpush.msra.mxu0 %v240
        %983 = vmatmul.f32.gmra.mxu0 %v941
        %v984 = vpop.f32.mrf.mxu0
        %v985 = vadd.f32 %v244, %v984
        %986 = vdwg.mxu0
        %988 = vset.pattern.permute.xlu0 0
        %989 = vperm.xlu0 %988, %v966
        %v990 = vpop.permute.xlu0 %989
        %v992 = vmul.f32 %v985, %v990
        %993 = vmatpush.msra.mxu0 0.0
        %994 = vmatpush.msra.mxu0 0.0
        %995 = vmatpush.msra.mxu0 0.0
        %996 = vmatpush.msra.mxu0 0.0
        %997 = vmatpush.msra.mxu0 0.0
        %998 = vmatpush.msra.mxu0 0.0
        %999 = vmatpush.msra.mxu0 0.0
        %1000 = vmatpush.msra.mxu0 0.0
        %1001 = vmatpush.msra.mxu0 0.0
        %1002 = vmatpush.msra.mxu0 0.0
        %1003 = vmatpush.msra.mxu0 0.0
        %1004 = vmatpush.msra.mxu0 0.0
        %1005 = vmatpush.msra.mxu0 0.0
        %1006 = vmatpush.msra.mxu0 0.0
        %1007 = vmatpush.msra.mxu0 %v243
        %1008 = vmatpush.msra.mxu0 %v242
        %1009 = vmatmul.f32.gmra.mxu0 %v941
        %v1010 = vpop.f32.mrf.mxu0
        %v1011 = vadd.f32 %v262, %v1010
        %1012 = vdwg.mxu0
        %v1013 = vmul.f32 %v1011, %v990
        %v1014 = vmul.f32 %v992, %v992
        %v1015 = vsub.f32 %v1013, %v1014
        %v1016 = vmax.f32 %v1015, 1e-20
        %v1017 = vsel %vm374, %v906, 0.0
        %v1018 = vsel %vm374, %v907, 0.0
        %v1019 = vadd.f32 %v1017, %v1018
        %v1020 = vrot.slane %v1019, 4
        %v1021 = vadd.f32 %v1019, %v1020
        %v1022 = vrot.slane %v1021, 2
        %v1023 = vadd.f32 %v1021, %v1022
        %v1024 = vrot.slane %v1023, 1
        %v1025 = vadd.f32 %v1023, %v1024
        %v1026 = vadd.f32 %v1025, 1.0
        %v1027 = vsel %vm374, %v1026, 0.0
        %1028 = vadd.xlane.f32.xlu0 %v1027
        %v1029 = vpop.xlane.xlu0 %1028
        %v1030 = vrcp.pop %v1029
        %v1031 = vmul.f32 %v1029, %v1030
        %v1032 = vsub.f32 2.0, %v1031
        %v1033 = vmul.f32 %v1030, %v1032
        %v1034 = vmul.f32 %v1026, %v1033
        %vm1035 = vcmask 24576
        %1036 = vst.msk [vmem:[%s220] sm:$0x1] %vm1035, %v1034
        %vm1037 = vcmask 60416
        %1038 = vst.msk [vmem:[%s227] sm:$0xf] %vm1037, %v992
        %1039 = vst.msk [vmem:[%s234] sm:$0xf] %vm1037, %v1016
        %s1040 = sand.u32 %s99, 1
        %s1041 = scalar_lea.sflag [#allocation3], %s1040
        %s1042 = sand.u32 %s99, 1
        %s1043 = scalar_lea.vmem [#allocation2], %s1042
        %s1044 = sand.u32 %s23, 1
        %s1045 = scalar_lea.sflag [#allocation5], %s1044
        %s1046 = sand.u32 %s125, 1
        %s1047 = smul.addr %s1046, 4
        %s1048 = scalar_lea.vmem [#allocation4], %s1047
        %s1049 = sand.u32 %s23, 1
        %s1050 = scalar_lea.sflag [#allocation5], %s1049
        %s1051 = sand.u32 %s151, 1
        %s1052 = smul.addr %s1051, 4
        %s1053 = scalar_lea.vmem [#allocation6], %s1052
        // Predicated region
        $region33: #{tpu_custom_call.1} parent=31 // pred_check
          %p1054 = pneg %p109
        $region34: #{tpu_custom_call.1} parent=31 // pred_check_branch
          %1056 = sbr.rel (%p1054) target = $region36
        $region35: #{tpu_custom_call.1} parent=31 // pred_region
          %1058 = vsyncadd %s1041, 0
          %s1059 = scalar_lea.hbm %s3, %s23
          %s1061 = sshll.u32 %s1043, 4
          %s1062 = int_to_ptr.vmem [resolvable:$true] %s1061
          %s1063 = sshll.u32 %s1059, 4
          %s1064 = int_to_ptr.hbm [resolvable:$true] %s1063
          %1066 = dma.vmem_to_hbm [thread:$0]  %s1062, 16, %s1064, %s1041
        $region36: #{tpu_custom_call.1} parent=31 // pred_fallthru
          _
        // Predicated region
        $region37: #{tpu_custom_call.1} parent=31 // pred_check
          %p1067 = pneg %p135
        $region38: #{tpu_custom_call.1} parent=31 // pred_check_branch
          %1069 = sbr.rel (%p1067) target = $region40
        $region39: #{tpu_custom_call.1} parent=31 // pred_region
          %1071 = vsyncadd %s1045, 0
          %s1072 = smul.addr %s23, 4
          %s1073 = scalar_lea.hbm %s4, %s1072
          %s1075 = sshll.u32 %s1048, 4
          %s1076 = int_to_ptr.vmem [resolvable:$true] %s1075
          %s1077 = sshll.u32 %s1073, 4
          %s1078 = int_to_ptr.hbm [resolvable:$true] %s1077
          %1080 = dma.vmem_to_hbm [thread:$0]  %s1076, 64, %s1078, %s1045
        $region40: #{tpu_custom_call.1} parent=31 // pred_fallthru
          _
        // Predicated region
        $region41: #{tpu_custom_call.1} parent=31 // pred_check
          %p1081 = pneg %p161
        $region42: #{tpu_custom_call.1} parent=31 // pred_check_branch
          %1083 = sbr.rel (%p1081) target = $region44
        $region43: #{tpu_custom_call.1} parent=31 // pred_region
          %1085 = vsyncadd %s1050, 0
          %s1086 = smul.addr %s23, 4
          %s1087 = scalar_lea.hbm %s5, %s1086
          %s1089 = sshll.u32 %s1053, 4
          %s1090 = int_to_ptr.vmem [resolvable:$true] %s1089
          %s1091 = sshll.u32 %s1087, 4
          %s1092 = int_to_ptr.hbm [resolvable:$true] %s1091
          %1094 = dma.vmem_to_hbm [thread:$0]  %s1090, 64, %s1092, %s1050
        $region44: #{tpu_custom_call.1} parent=31 // pred_fallthru
          _
      $region32: #{tpu_custom_call.1} parent=5 // pred_fallthru
        _
      %p1095 = scmp.le.s32.totalorder 2, %s18
      // Predicated region
      $region45: #{tpu_custom_call.1} parent=5 // pred_check
        %p1096 = pneg %p1095
      $region46: #{tpu_custom_call.1} parent=5 // pred_check_branch
        %1098 = sbr.rel (%p1096) target = $region48
      $region47: #{tpu_custom_call.1} parent=5 // pred_region
        %s1099 = ssub.s32 %s18, 2
        // Predicated region
        $region49: #{tpu_custom_call.1} parent=47 // pred_check
          %p1100 = pneg %p115
        $region50: #{tpu_custom_call.1} parent=47 // pred_check_branch
          %1102 = sbr.rel (%p1100) target = $region52
        $region51: #{tpu_custom_call.1} parent=47 // pred_region
          %s1103 = sand.u32 %s100, 1
          %s1104 = scalar_lea.sflag [#allocation3], %s1103
          %s1105 = sand.u32 %s100, 1
          %s1106 = scalar_lea.vmem [#allocation2], %s1105
          %1108 = dma.done %s1104, 16
        $region52: #{tpu_custom_call.1} parent=47 // pred_fallthru
          _
        // Predicated region
        $region53: #{tpu_custom_call.1} parent=47 // pred_check
          %p1109 = pneg %p141
        $region54: #{tpu_custom_call.1} parent=47 // pred_check_branch
          %1111 = sbr.rel (%p1109) target = $region56
        $region55: #{tpu_custom_call.1} parent=47 // pred_region
          %s1112 = sand.u32 %s24, 1
          %s1113 = scalar_lea.sflag [#allocation5], %s1112
          %s1114 = sand.u32 %s126, 1
          %s1115 = smul.addr %s1114, 4
          %s1116 = scalar_lea.vmem [#allocation4], %s1115
          %1118 = dma.done %s1113, 64
        $region56: #{tpu_custom_call.1} parent=47 // pred_fallthru
          _
        // Predicated region
        $region57: #{tpu_custom_call.1} parent=47 // pred_check
          %p1119 = pneg %p167
        $region58: #{tpu_custom_call.1} parent=47 // pred_check_branch
          %1121 = sbr.rel (%p1119) target = $region60
        $region59: #{tpu_custom_call.1} parent=47 // pred_region
          %s1122 = sand.u32 %s24, 1
          %s1123 = scalar_lea.sflag [#allocation5], %s1122
          %s1124 = sand.u32 %s152, 1
          %s1125 = smul.addr %s1124, 4
          %s1126 = scalar_lea.vmem [#allocation6], %s1125
          %1128 = dma.done %s1123, 64
        $region60: #{tpu_custom_call.1} parent=47 // pred_fallthru
          _
      $region48: #{tpu_custom_call.1} parent=5 // pred_fallthru
        _
    $region6: #{tpu_custom_call.1} parent=1 // loop_footer
      %s22 = sadd.s32 1, %s18
    $region7: #{tpu_custom_call.1} parent=1 // loop_footer_branch
      %17 = sbr.rel target = $region3
    $region8: #{tpu_custom_call.1} parent=1 // loop_exit
      _
    %1129 = vsyncpa [#allocation3], 1
    %s1130 = scalar_lea.sflag [#allocation3], 1
    %1131 = vsyncpa %s1130, 1
    %1132 = vsyncpa [#allocation5], 1
    %s1133 = scalar_lea.sflag [#allocation5], 1
    %1134 = vsyncpa %s1133, 1

</llo_original>
